<compile_context>
chip_gen: v6e
topology: v6e:2x2x1
jax: 0.10.0
libtpu: 0.0.40
codegen_flags: <defaults>
</compile_context>

<pallas_src>
import jax
import jax.numpy as jnp
import numpy as np
from jax import lax
from jax.experimental import pallas as pl
from jax.experimental.pallas import tpu as pltpu


# ------------------------------ fused kernel --------------------------------

def dta_kernel(x_ref, spk_ref, w1t_ref, w2t_ref, wsp_ref, wtt_ref, out_ref):
    """Fused DTA forward for one block of B_blk batch elements.

    x_ref / spk_ref / out_ref : (B_blk, TC, HW)   HW lane-dense (mult. of 128)
    w1t_ref : (TC, TC_r)    channel-MLP layer-1 weight, transposed
    w2t_ref : (TC_r, TC)    channel-MLP layer-2 weight, transposed
    wsp_ref : (2*HW, HW)    folded 7x7 SAME conv operator (avg;max), bf16
    wtt_ref : (TC, TC)      folded Conv1d(T,T,3,SAME) operator, transposed
    """
    f32 = jnp.float32
    x = x_ref[...].astype(f32)                           # (Bb, TC, HW)
    Bb = x.shape[0]

    # ---- global pools (all lane/sublane reductions stay in VMEM regs) ----
    ch_avg = jnp.mean(x, axis=2)                         # (Bb, TC)
    ch_max = jnp.max(x, axis=2)                          # (Bb, TC)
    sp_avg = jnp.mean(x, axis=1)                         # (Bb, HW)
    sp_max = jnp.max(x, axis=1)                          # (Bb, HW)

    # ---- T_NA channel attention: fused shared MLP (one w1 + one w2 pass) ----
    stats = jnp.concatenate([ch_avg, ch_max], axis=0)    # (2*Bb, TC)
    h = jnp.maximum(
        jnp.dot(stats, w1t_ref[...], preferred_element_type=f32), 0.0)
    h = h[:Bb] + h[Bb:]                                  # (Bb, TC_r)
    ca = jnp.dot(h, w2t_ref[...], preferred_element_type=f32)     # (Bb, TC)

    # ---- T_NA spatial attention: single fused (2*HW, HW) bf16 operator ----
    sp = jnp.concatenate([sp_avg, sp_max], axis=1).astype(wsp_ref.dtype)
    sa = jnp.dot(sp, wsp_ref[...], preferred_element_type=f32)    # (Bb, HW)

    # ---- T_XA temporal attention: folded Conv1d(T,T,3) operator ----
    txa = jnp.dot(ch_avg, wtt_ref[...], preferred_element_type=f32)  # (Bb, TC)

    # ---- combine: out = sigmoid((ca*txa) * sa) * spikes, one lane-dense store
    z = (ca * txa)[:, :, None] * sa[:, None, :]          # (Bb, TC, HW)
    gate = pl.reciprocal(1.0 + jnp.exp(-z), approx=True) # sigmoid via EUP
    out_ref[...] = (gate * spk_ref[...].astype(f32)).astype(out_ref.dtype)


# ------------------- host-side weight-operator construction -----------------

def _build_spatial_operators(w_sp, H, W):
    """7x7 SAME 2-D conv (2 input maps -> 1 output map) as two explicit
    (H*W, H*W) linear operators acting on flattened spatial maps."""
    _, cin, KH, KW = w_sp.shape
    ph, pw = KH // 2, KW // 2
    HW = H * W
    idx = jnp.arange(HW)
    hi, wi = (idx // W)[:, None], (idx % W)[:, None]     # input positions (rows)
    hj, wj = (idx // W)[None, :], (idx % W)[None, :]     # output positions (cols)
    dh, dw = hi - hj, wi - wj
    valid = (jnp.abs(dh) <= ph) & (jnp.abs(dw) <= pw)
    kh = jnp.clip(dh + ph, 0, KH - 1)
    kw = jnp.clip(dw + pw, 0, KW - 1)
    return tuple(
        jnp.where(valid, w_sp[0, c][kh, kw], 0.0).astype(jnp.float32)
        for c in range(cin))                             # each (HW, HW)


def _build_temporal_operator(w_t, T, C):
    """Conv1d(T, T, K, SAME, bias=False) over the C axis of a (T, C) map,
    expressed as a (T*C, T*C) operator on the flattened column (index t*C+c)."""
    K = w_t.shape[-1]
    pad = K // 2
    TC = T * C
    idx = jnp.arange(TC)
    t_out, c_out = (idx // C)[:, None], (idx % C)[:, None]
    u_in, c_in = (idx // C)[None, :], (idx % C)[None, :]
    dc = c_in - c_out
    valid = jnp.abs(dc) <= pad
    k = jnp.clip(dc + pad, 0, K - 1)
    vals = w_t[t_out, u_in, k]                           # (TC, TC)
    return jnp.where(valid, vals, 0.0).astype(jnp.float32)


def prepare_dta_params(params, T, C, H, W):
    """One-time weight transform (no activation data involved)."""
    f32 = jnp.float32
    wsp_a, wsp_m = _build_spatial_operators(params["w_sp"].astype(f32), H, W)
    # Single fused spatial operator, bf16 (MXU already runs bf16 passes for
    # default-precision f32, so this only halves weight DMA / VMEM residency).
    wsp_cat = jnp.concatenate([wsp_a, wsp_m], axis=0).astype(jnp.bfloat16)
    wt_mat = _build_temporal_operator(params["w_t"].astype(f32), T, C)
    return {
        "w1t": jnp.asarray(params["w1"].astype(f32).T),   # (TC, TC_r)
        "w2t": jnp.asarray(params["w2"].astype(f32).T),   # (TC_r, TC)
        "wsp_cat": wsp_cat,                               # (2*HW, HW) bf16
        "wtt": jnp.asarray(wt_mat.T),                     # (TC, TC)  f32 (tiny)
    }


# ------------------------------ host wrapper ---------------------------------

def _pick_batch_block(B, max_blk=8):
    """Largest divisor of B that is <= max_blk while keeping >= 2 grid steps
    when B >= 2 (so v7x's two TensorCores both get work)."""
    if B <= 1:
        return 1
    cap = max(1, min(max_blk, B // 2))
    for cand in range(cap, 0, -1):
        if B % cand == 0:
            return cand
    return 1


def dta_forward(x_seq, spikes, prep, *, max_batch_block=8):
    B, T, C, H, W = x_seq.shape
    TC, HW = T * C, H * W
    # Native dtypes all the way; casts happen in-register inside the kernel.
    x2 = x_seq.reshape(B, TC, HW)
    spk2 = spikes.reshape(B, TC, HW)

    Bb = _pick_batch_block(B, max_batch_block)
    grid = (B // Bb,)

    batch_spec = pl.BlockSpec((Bb, TC, HW), lambda b: (b, 0, 0))

    def const_spec(arr):
        nd = arr.ndim
        return pl.BlockSpec(arr.shape, lambda b, _nd=nd: (0,) * _nd)

    w1t, w2t, wsp, wtt = prep["w1t"], prep["w2t"], prep["wsp_cat"], prep["wtt"]

    # Explicit scoped-VMEM budget (block activations double-buffered + weights
    # + intermediates), with headroom; matters on v5e's 16 MiB default.
    blk_bytes = Bb * TC * HW * x2.dtype.itemsize
    weight_bytes = sum(int(w.size) * w.dtype.itemsize for w in (w1t, w2t, wsp, wtt))
    vmem_limit = int(2 * 3 * blk_bytes + 2 * weight_bytes + 6 * blk_bytes) + (2 << 20)
    vmem_limit = max(8 << 20, min(vmem_limit, 64 << 20))

    out2 = pl.pallas_call(
        dta_kernel,
        out_shape=jax.ShapeDtypeStruct((B, TC, HW), x_seq.dtype),
        grid=grid,
        in_specs=[batch_spec,            # x2 block
                  batch_spec,            # spikes block
                  const_spec(w1t),       # channel MLP layer 1 (transposed)
                  const_spec(w2t),       # channel MLP layer 2 (transposed)
                  const_spec(wsp),       # fused spatial conv operator (bf16)
                  const_spec(wtt)],      # temporal conv operator (transposed)
        out_specs=batch_spec,
        compiler_params=pltpu.CompilerParams(
            dimension_semantics=("parallel",),
            vmem_limit_bytes=vmem_limit),
    )(x2, spk2, w1t, w2t, wsp, wtt)

    return out2.reshape(B, T, C, H, W)


# ------------------------- pure-JAX reference check --------------------------

def dta_reference(x_seq, spikes, params):
    B, T, C, H, W = x_seq.shape
    TC = T * C
    x2 = x_seq.reshape(B, TC, H, W)
    ch_avg = x2.mean(axis=(2, 3))
    ch_max = x2.max(axis=(2, 3))
    mlp = lambda v: jnp.maximum(v @ params["w1"].T, 0.0) @ params["w2"].T
    ca = mlp(ch_avg) + mlp(ch_max)                                    # (B, TC)
    sp = jnp.stack([x2.mean(axis=1), x2.max(axis=1)], axis=1)         # (B,2,H,W)
    sa = lax.conv_general_dilated(sp, params["w_sp"], (1, 1), "SAME",
                                  dimension_numbers=("NCHW", "OIHW", "NCHW"))[:, 0]
    t_na = (ca[:, :, None, None] * sa[:, None, :, :]).reshape(B, T, C, H, W)
    avg_t = x_seq.mean(axis=(3, 4))                                   # (B,T,C)
    txa = lax.conv_general_dilated(avg_t, params["w_t"], (1,), "SAME",
                                   dimension_numbers=("NCH", "OIH", "NCH"))
    t_xa = txa[:, :, :, None, None]
    return jax.nn.sigmoid(t_na * t_xa) * spikes


# ----------------------------------- main ------------------------------------

if __name__ == "__main__":
    B, T, C, H, W = 8, 4, 8, 16, 16       # B=8 -> B_blk=4, grid=(2,)
    TC = T * C
    r = 4                                 # channel-MLP reduction ratio

    key = jax.random.PRNGKey(0)
    k1, k2, k3, k4, k5, k6 = jax.random.split(key, 6)
    w1 = jax.random.normal(k1, (TC // r, TC), jnp.float32) / jnp.sqrt(TC)
    w2 = jax.random.normal(k2, (TC, TC // r), jnp.float32) / jnp.sqrt(TC // r)
    w_sp = jax.random.normal(k3, (1, 2, 7, 7), jnp.float32) * 0.1
    w_t = jax.random.normal(k4, (T, T, 3), jnp.float32) * 0.3

    params = {"w1": w1, "w2": w2, "w_sp": w_sp, "w_t": w_t}
    prep = prepare_dta_params(params, T, C, H, W)

    x_seq = jax.random.normal(k5, (B, T, C, H, W), jnp.float32)
    spikes = jax.random.bernoulli(k6, 0.5, (B, T, C, H, W)).astype(jnp.float32)

    y = dta_forward(x_seq, spikes, prep)
    jax.block_until_ready(y)

    y_ref = dta_reference(x_seq, spikes, params)
    assert y.shape == (B, T, C, H, W)
    # bf16 MXU passes on both sides + bf16 spatial operator + approx-reciprocal
    # sigmoid -> slightly loosened tolerance (outputs bounded in [0,1]).
    np.testing.assert_allclose(np.asarray(y), np.asarray(y_ref),
                               rtol=1e-2, atol=1e-2)
    print("KERNEL_OK")
</pallas_src>

<mosaic_0001>
module attributes {stable_mosaic.version = 11 : i64} {
  func.func @dta_kernel(%arg0: i32, %arg1: memref<4x32x256xf32, #tpu.memory_space<vmem>>, %arg2: memref<4x32x256xf32, #tpu.memory_space<vmem>>, %arg3: memref<32x8xf32, #tpu.memory_space<vmem>>, %arg4: memref<8x32xf32, #tpu.memory_space<vmem>>, %arg5: memref<512x256xbf16, #tpu.memory_space<vmem>>, %arg6: memref<32x32xf32, #tpu.memory_space<vmem>>, %arg7: memref<4x32x256xf32, #tpu.memory_space<vmem>>) attributes {dimension_semantics = [#tpu.dimension_semantics<parallel>], iteration_bounds = array<i64: 2>, scalar_prefetch = 0 : i64, scratch_operands = 0 : i64, tpu.core_type = #tpu.core_type<tc>, window_params = [{transform_indices = @transform_0, window_bounds = array<i64: 4, 32, 256>}, {transform_indices = @transform_1, window_bounds = array<i64: 4, 32, 256>}, {pipeline_mode = #tpu.pipeline_mode<synchronous>, transform_indices = @transform_2, window_bounds = array<i64: 32, 8>}, {pipeline_mode = #tpu.pipeline_mode<synchronous>, transform_indices = @transform_3, window_bounds = array<i64: 8, 32>}, {pipeline_mode = #tpu.pipeline_mode<synchronous>, transform_indices = @transform_4, window_bounds = array<i64: 512, 256>}, {pipeline_mode = #tpu.pipeline_mode<synchronous>, transform_indices = @transform_5, window_bounds = array<i64: 32, 32>}, {transform_indices = @transform_6, window_bounds = array<i64: 4, 32, 256>}]} {
    %c0 = arith.constant 0 : index
    %c0_0 = arith.constant 0 : index
    %c0_1 = arith.constant 0 : index
    %0 = vector.load %arg1[%c0, %c0_0, %c0_1] : memref<4x32x256xf32, #tpu.memory_space<vmem>>, vector<4x32x256xf32>
    %cst = arith.constant dense<0.000000e+00> : vector<4x32xf32>
    %1 = vector.multi_reduction <add>, %0, %cst [2] : vector<4x32x256xf32> to vector<4x32xf32>
    %cst_2 = arith.constant 2.560000e+02 : f32
    %2 = vector.broadcast %cst_2 : f32 to vector<4x32xf32>
    %3 = arith.divf %1, %2 : vector<4x32xf32>
    %cst_3 = arith.constant dense<0xFF800000> : vector<4x32xf32>
    %4 = vector.multi_reduction <maximumf>, %0, %cst_3 [2] : vector<4x32x256xf32> to vector<4x32xf32>
    %cst_4 = arith.constant dense<0.000000e+00> : vector<4x256xf32>
    %5 = vector.multi_reduction <add>, %0, %cst_4 [1] : vector<4x32x256xf32> to vector<4x256xf32>
    %cst_5 = arith.constant 3.200000e+01 : f32
    %6 = vector.broadcast %cst_5 : f32 to vector<4x256xf32>
    %7 = arith.divf %5, %6 : vector<4x256xf32>
    %cst_6 = arith.constant dense<0xFF800000> : vector<4x256xf32>
    %8 = vector.multi_reduction <maximumf>, %0, %cst_6 [1] : vector<4x32x256xf32> to vector<4x256xf32>
    %9 = tpu.concatenate %3, %4 in 0 : vector<4x32xf32>, vector<4x32xf32> -> vector<8x32xf32>
    %c0_7 = arith.constant 0 : index
    %c0_8 = arith.constant 0 : index
    %10 = vector.load %arg3[%c0_7, %c0_8] : memref<32x8xf32, #tpu.memory_space<vmem>>, vector<32x8xf32>
    %cst_9 = arith.constant dense<0.000000e+00> : vector<8x8xf32>
    %11 = tpu.matmul %9, %10, %cst_9 {dimension_numbers = #tpu.dot_dimension_numbers<[1], [0], [0], [1], [0, 0, 1, 1], [], []>} : vector<8x32xf32>, vector<32x8xf32>, vector<8x8xf32> -> vector<8x8xf32>
    %cst_10 = arith.constant 0.000000e+00 : f32
    %12 = vector.broadcast %cst_10 : f32 to vector<8x8xf32>
    %13 = arith.maximumf %11, %12 : vector<8x8xf32>
    %14 = vector.extract_strided_slice %13 {offsets = [0, 0], sizes = [4, 8], strides = [1, 1]} : vector<8x8xf32> to vector<4x8xf32>
    %15 = vector.extract_strided_slice %13 {offsets = [4, 0], sizes = [4, 8], strides = [1, 1]} : vector<8x8xf32> to vector<4x8xf32>
    %16 = arith.addf %14, %15 : vector<4x8xf32>
    %c0_11 = arith.constant 0 : index
    %c0_12 = arith.constant 0 : index
    %17 = vector.load %arg4[%c0_11, %c0_12] : memref<8x32xf32, #tpu.memory_space<vmem>>, vector<8x32xf32>
    %cst_13 = arith.constant dense<0.000000e+00> : vector<4x32xf32>
    %18 = tpu.matmul %16, %17, %cst_13 {dimension_numbers = #tpu.dot_dimension_numbers<[1], [0], [0], [1], [0, 0, 1, 1], [], []>} : vector<4x8xf32>, vector<8x32xf32>, vector<4x32xf32> -> vector<4x32xf32>
    %19 = tpu.concatenate %7, %8 in 1 : vector<4x256xf32>, vector<4x256xf32> -> vector<4x512xf32>
    %20 = arith.truncf %19 : vector<4x512xf32> to vector<4x512xbf16>
    %c0_14 = arith.constant 0 : index
    %c0_15 = arith.constant 0 : index
    %21 = vector.load %arg5[%c0_14, %c0_15] : memref<512x256xbf16, #tpu.memory_space<vmem>>, vector<512x256xbf16>
    %cst_16 = arith.constant dense<0.000000e+00> : vector<4x256xf32>
    %22 = tpu.matmul %20, %21, %cst_16 {dimension_numbers = #tpu.dot_dimension_numbers<[1], [0], [0], [1], [0, 0, 1, 1], [], []>} : vector<4x512xbf16>, vector<512x256xbf16>, vector<4x256xf32> -> vector<4x256xf32>
    %c0_17 = arith.constant 0 : index
    %c0_18 = arith.constant 0 : index
    %23 = vector.load %arg6[%c0_17, %c0_18] : memref<32x32xf32, #tpu.memory_space<vmem>>, vector<32x32xf32>
    %cst_19 = arith.constant dense<0.000000e+00> : vector<4x32xf32>
    %24 = tpu.matmul %3, %23, %cst_19 {dimension_numbers = #tpu.dot_dimension_numbers<[1], [0], [0], [1], [0, 0, 1, 1], [], []>} : vector<4x32xf32>, vector<32x32xf32>, vector<4x32xf32> -> vector<4x32xf32>
    %25 = arith.mulf %18, %24 : vector<4x32xf32>
    %26 = vector.shape_cast %25 : vector<4x32xf32> to vector<4x32x1xf32>
    %27 = vector.shape_cast %22 : vector<4x256xf32> to vector<4x1x256xf32>
    %28 = vector.broadcast %26 : vector<4x32x1xf32> to vector<4x32x256xf32>
    %29 = vector.broadcast %27 : vector<4x1x256xf32> to vector<4x32x256xf32>
    %30 = arith.mulf %28, %29 : vector<4x32x256xf32>
    %cst_20 = arith.constant 0.000000e+00 : f32
    %31 = vector.broadcast %cst_20 : f32 to vector<4x32x256xf32>
    %32 = arith.subf %31, %30 : vector<4x32x256xf32>
    %33 = math.exp %32 : vector<4x32x256xf32>
    %cst_21 = arith.constant 1.000000e+00 : f32
    %34 = vector.broadcast %cst_21 : f32 to vector<4x32x256xf32>
    %35 = arith.addf %34, %33 : vector<4x32x256xf32>
    %36 = tpu.reciprocal %35 {approx = true} : vector<4x32x256xf32> -> vector<4x32x256xf32>
    %c0_22 = arith.constant 0 : index
    %c0_23 = arith.constant 0 : index
    %c0_24 = arith.constant 0 : index
    %37 = vector.load %arg2[%c0_22, %c0_23, %c0_24] : memref<4x32x256xf32, #tpu.memory_space<vmem>>, vector<4x32x256xf32>
    %38 = arith.mulf %36, %37 : vector<4x32x256xf32>
    %c0_25 = arith.constant 0 : index
    %c0_26 = arith.constant 0 : index
    %c0_27 = arith.constant 0 : index
    %39 = vector.load %arg7[%c0_25, %c0_26, %c0_27] : memref<4x32x256xf32, #tpu.memory_space<vmem>>, vector<4x32x256xf32>
    tpu.vector_store %arg7[%c0_25, %c0_26, %c0_27], %38 {strides = array<i32>} : memref<4x32x256xf32, #tpu.memory_space<vmem>>, vector<4x32x256xf32>,
    return
  }
  func.func @transform_0(%arg0: i32) -> (i32, i32, i32) {
    %c0_i32 = arith.constant 0 : i32
    %c0_i32_0 = arith.constant 0 : i32
    %c0_i32_1 = arith.constant 0 : i32
    return %arg0, %c0_i32, %c0_i32_0 : i32, i32, i32
  }
  func.func @transform_1(%arg0: i32) -> (i32, i32, i32) {
    %c0_i32 = arith.constant 0 : i32
    %c0_i32_0 = arith.constant 0 : i32
    %c0_i32_1 = arith.constant 0 : i32
    return %arg0, %c0_i32, %c0_i32_0 : i32, i32, i32
  }
  func.func @transform_2(%arg0: i32) -> (i32, i32) {
    %c0_i32 = arith.constant 0 : i32
    %c0_i32_0 = arith.constant 0 : i32
    %c0_i32_1 = arith.constant 0 : i32
    return %c0_i32, %c0_i32_0 : i32, i32
  }
  func.func @transform_3(%arg0: i32) -> (i32, i32) {
    %c0_i32 = arith.constant 0 : i32
    %c0_i32_0 = arith.constant 0 : i32
    %c0_i32_1 = arith.constant 0 : i32
    return %c0_i32, %c0_i32_0 : i32, i32
  }
  func.func @transform_4(%arg0: i32) -> (i32, i32) {
    %c0_i32 = arith.constant 0 : i32
    %c0_i32_0 = arith.constant 0 : i32
    %c0_i32_1 = arith.constant 0 : i32
    return %c0_i32, %c0_i32_0 : i32, i32
  }
  func.func @transform_5(%arg0: i32) -> (i32, i32) {
    %c0_i32 = arith.constant 0 : i32
    %c0_i32_0 = arith.constant 0 : i32
    %c0_i32_1 = arith.constant 0 : i32
    return %c0_i32, %c0_i32_0 : i32, i32
  }
  func.func @transform_6(%arg0: i32) -> (i32, i32, i32) {
    %c0_i32 = arith.constant 0 : i32
    %c0_i32_0 = arith.constant 0 : i32
    %c0_i32_1 = arith.constant 0 : i32
    return %arg0, %c0_i32, %c0_i32_0 : i32, i32, i32
  }
}

</mosaic_0001>

<llo_original>
// kernel: tpu_custom_call.1
$region0: #{tpu_custom_call.1}
  #allocation0 [shape = 'u32[]', space=smem, size = 0x4, offset = 0x4, fixed_abs, tag = 'smem constant byte address 0x4 - core index']
  #allocation1 [shape = 'u32[144,128]{1,0:T(1,128)}', space=vmem, size = 0x12000, scoped, tag = 'internal scratch']
  %s0 = inlined_call_operand.hbm [shape: f32[8,32,256], index: 0, kind: input, shape index: {}]
  %s1 = inlined_call_operand.hbm [shape: f32[8,32,256], index: 1, kind: input, shape index: {}]
  %s2 = inlined_call_operand.vmem [shape: f32[32,8], index: 2, kind: input, shape index: {}]
  %s3 = inlined_call_operand.vmem [shape: f32[8,32], index: 3, kind: input, shape index: {}]
  %s4 = inlined_call_operand.hbm [shape: bf16[512,256], index: 4, kind: input, shape index: {}]
  %s5 = inlined_call_operand.vmem [shape: f32[32,32], index: 5, kind: input, shape index: {}]
  %s6 = inlined_call_operand.hbm [shape: f32[8,32,256], index: 6, kind: output, shape index: {}]
  %s7 = sld [smem:[#allocation0]]
  $region69: #{tpu_custom_call.1} parent=0
    _
  %s9 = ssub.s32 1, %s7
  %s10 = scalar_select 0, %s9, %s7
  $region1: #{tpu_custom_call.1} parent=0
    #allocation2 [shape = 'u8[262144]{0}', space=vmem, size = 0x40000, scoped, tag = 'input window, operand 0']
    #allocation3 [shape = 's32[2]{0}', space=sflag, size = 0x8, scoped, tag = 'scoped memory for tpu_custom_call.1']
    #allocation4 [shape = 's32[2]{0}', space=sflag, size = 0x8, scoped, tag = 'scoped memory for tpu_custom_call.1']
    #allocation5 [shape = 'u8[262144]{0}', space=vmem, size = 0x40000, scoped, tag = 'input window, operand 1']
    #allocation6 [shape = 's32[2]{0}', space=sflag, size = 0x8, scoped, tag = 'scoped memory for tpu_custom_call.1']
    #allocation7 [shape = 'u8[262144]{0}', space=vmem, size = 0x40000, scoped, tag = 'input window, operand 4, single buffered']
    #allocation8 [shape = 'u8[262144]{0}', space=vmem, size = 0x40000, scoped, tag = 'output window, operand 0']
    %11 = vsyncpa [#allocation3], 0
    %s12 = scalar_lea.sflag [#allocation3], 1
    %13 = vsyncpa %s12, 0
    %14 = vsyncpa [#allocation6], 0
    %s15 = scalar_lea.sflag [#allocation6], 1
    %16 = vsyncpa %s15, 0
    %17 = vsyncpa [#allocation4], 0
    %s18 = scalar_lea.sflag [#allocation4], 1
    %19 = vsyncpa %s18, 0
    loop: start=0, step=1, limit=4
    $region2: #{tpu_custom_call.1} parent=1 // loop_pre_header
      _
    $region3: #{tpu_custom_call.1} parent=1 // loop_header
      %s21 = sphi 0, %s25
      %p22 = scmp.ge.s32.totalorder %s21, 4
      %s31 = sphi 0, %s33
      %s34 = sphi 0, %s31
      %s35 = sphi 0, %s34
      %s51 = sphi 0, %s35
      %s57 = sphi 0, %s59
      %s60 = sphi 0, %s57
      %s61 = sphi 0, %s60
      %s77 = sphi 0, %s61
      %s81 = sphi 0, %s81
      %s83 = sphi 0, %s81
      %s84 = sphi 0, %s83
      %s98 = sphi 0, %s84
      %s102 = sphi 0, %s102
      %s104 = sphi 0, %s102
      %s105 = sphi 0, %s104
      %s119 = sphi 0, %s105
      %s123 = sphi 0, %s123
      %s125 = sphi 0, %s123
      %s126 = sphi 0, %s125
      %s140 = sphi 0, %s126
      %s144 = sphi 0, %s144
      %s146 = sphi 0, %s144
      %s147 = sphi 0, %s146
      %s161 = sphi 0, %s147
      %s167 = sphi 0, %s169
      %s170 = sphi 0, %s167
      %s171 = sphi 0, %s170
      %s187 = sphi 0, %s171
    $region4: #{tpu_custom_call.1} parent=1 // loop_header_branch
      %24 = sbr.rel (%p22) target = $region8
    $region5: #{tpu_custom_call.1} parent=1 // loop_body
      %s26 = ssub.s32 %s21, 1
      %s27 = ssub.s32 %s21, 2
      %s28 = sadd.s32 %s21, 1
      %s29 = ssub.s32 %s21, %s28
      %p30 = scmp.eq.s32.totalorder %s29, 0
      %s32 = sadd.s32 %s31, 1
      %s33 = scalar_select %p30, %s31, %s32
      %p36 = pneg %p30
      %p37 = scmp.eq.s32.totalorder %s21, 1
      %p38 = por %p36, %p37
      %p39 = scmp.ne.s32.totalorder %s31, %s34
      %p40 = scmp.eq.s32.totalorder %s21, 0
      %p41 = por %p39, %p40
      %p42 = scmp.ne.s32.totalorder %s31, %s34
      %p43 = scmp.eq.s32.totalorder %s26, 1
      %p44 = por %p42, %p43
      %p45 = scmp.ne.s32.totalorder %s34, %s35
      %p46 = scmp.eq.s32.totalorder %s26, 0
      %p47 = por %p45, %p46
      %p48 = scmp.ne.s32.totalorder %s34, %s35
      %p49 = scmp.eq.s32.totalorder %s27, 1
      %p50 = por %p48, %p49
      %p52 = scmp.ne.s32.totalorder %s35, %s51
      %p53 = scmp.eq.s32.totalorder %s27, 0
      %p54 = por %p52, %p53
      %s55 = ssub.s32 %s21, %s28
      %p56 = scmp.eq.s32.totalorder %s55, 0
      %s58 = sadd.s32 %s57, 1
      %s59 = scalar_select %p56, %s57, %s58
      %p62 = pneg %p56
      %p63 = scmp.eq.s32.totalorder %s21, 1
      %p64 = por %p62, %p63
      %p65 = scmp.ne.s32.totalorder %s57, %s60
      %p66 = scmp.eq.s32.totalorder %s21, 0
      %p67 = por %p65, %p66
      %p68 = scmp.ne.s32.totalorder %s57, %s60
      %p69 = scmp.eq.s32.totalorder %s26, 1
      %p70 = por %p68, %p69
      %p71 = scmp.ne.s32.totalorder %s60, %s61
      %p72 = scmp.eq.s32.totalorder %s26, 0
      %p73 = por %p71, %p72
      %p74 = scmp.ne.s32.totalorder %s60, %s61
      %p75 = scmp.eq.s32.totalorder %s27, 1
      %p76 = por %p74, %p75
      %p78 = scmp.ne.s32.totalorder %s61, %s77
      %p79 = scmp.eq.s32.totalorder %s27, 0
      %p80 = por %p78, %p79
      %s82 = sadd.s32 %s81, 1
      %p85 = scmp.eq.s32.totalorder %s21, 1
      %p86 = scmp.ne.s32.totalorder %s81, %s83
      %p87 = scmp.eq.s32.totalorder %s21, 0
      %p88 = por %p86, %p87
      %p89 = scmp.ne.s32.totalorder %s81, %s83
      %p90 = scmp.eq.s32.totalorder %s26, 1
      %p91 = por %p89, %p90
      %p92 = scmp.ne.s32.totalorder %s83, %s84
      %p93 = scmp.eq.s32.totalorder %s26, 0
      %p94 = por %p92, %p93
      %p95 = scmp.ne.s32.totalorder %s83, %s84
      %p96 = scmp.eq.s32.totalorder %s27, 1
      %p97 = por %p95, %p96
      %p99 = scmp.ne.s32.totalorder %s84, %s98
      %p100 = scmp.eq.s32.totalorder %s27, 0
      %p101 = por %p99, %p100
      %s103 = sadd.s32 %s102, 1
      %p106 = scmp.eq.s32.totalorder %s21, 1
      %p107 = scmp.ne.s32.totalorder %s102, %s104
      %p108 = scmp.eq.s32.totalorder %s21, 0
      %p109 = por %p107, %p108
      %p110 = scmp.ne.s32.totalorder %s102, %s104
      %p111 = scmp.eq.s32.totalorder %s26, 1
      %p112 = por %p110, %p111
      %p113 = scmp.ne.s32.totalorder %s104, %s105
      %p114 = scmp.eq.s32.totalorder %s26, 0
      %p115 = por %p113, %p114
      %p116 = scmp.ne.s32.totalorder %s104, %s105
      %p117 = scmp.eq.s32.totalorder %s27, 1
      %p118 = por %p116, %p117
      %p120 = scmp.ne.s32.totalorder %s105, %s119
      %p121 = scmp.eq.s32.totalorder %s27, 0
      %p122 = por %p120, %p121
      %s124 = sadd.s32 %s123, 1
      %p127 = scmp.eq.s32.totalorder %s21, 1
      %p128 = scmp.ne.s32.totalorder %s123, %s125
      %p129 = scmp.eq.s32.totalorder %s21, 0
      %p130 = por %p128, %p129
      %p131 = scmp.ne.s32.totalorder %s123, %s125
      %p132 = scmp.eq.s32.totalorder %s26, 1
      %p133 = por %p131, %p132
      %p134 = scmp.ne.s32.totalorder %s125, %s126
      %p135 = scmp.eq.s32.totalorder %s26, 0
      %p136 = por %p134, %p135
      %p137 = scmp.ne.s32.totalorder %s125, %s126
      %p138 = scmp.eq.s32.totalorder %s27, 1
      %p139 = por %p137, %p138
      %p141 = scmp.ne.s32.totalorder %s126, %s140
      %p142 = scmp.eq.s32.totalorder %s27, 0
      %p143 = por %p141, %p142
      %s145 = sadd.s32 %s144, 1
      %p148 = scmp.eq.s32.totalorder %s21, 1
      %p149 = scmp.ne.s32.totalorder %s144, %s146
      %p150 = scmp.eq.s32.totalorder %s21, 0
      %p151 = por %p149, %p150
      %p152 = scmp.ne.s32.totalorder %s144, %s146
      %p153 = scmp.eq.s32.totalorder %s26, 1
      %p154 = por %p152, %p153
      %p155 = scmp.ne.s32.totalorder %s146, %s147
      %p156 = scmp.eq.s32.totalorder %s26, 0
      %p157 = por %p155, %p156
      %p158 = scmp.ne.s32.totalorder %s146, %s147
      %p159 = scmp.eq.s32.totalorder %s27, 1
      %p160 = por %p158, %p159
      %p162 = scmp.ne.s32.totalorder %s147, %s161
      %p163 = scmp.eq.s32.totalorder %s27, 0
      %p164 = por %p162, %p163
      %s165 = ssub.s32 %s21, %s28
      %p166 = scmp.eq.s32.totalorder %s165, 0
      %s168 = sadd.s32 %s167, 1
      %s169 = scalar_select %p166, %s167, %s168
      %p172 = pneg %p166
      %p173 = scmp.eq.s32.totalorder %s21, 1
      %p174 = por %p172, %p173
      %p175 = scmp.ne.s32.totalorder %s167, %s170
      %p176 = scmp.eq.s32.totalorder %s21, 0
      %p177 = por %p175, %p176
      %p178 = scmp.ne.s32.totalorder %s167, %s170
      %p179 = scmp.eq.s32.totalorder %s26, 1
      %p180 = por %p178, %p179
      %p181 = scmp.ne.s32.totalorder %s170, %s171
      %p182 = scmp.eq.s32.totalorder %s26, 0
      %p183 = por %p181, %p182
      %p184 = scmp.ne.s32.totalorder %s170, %s171
      %p185 = scmp.eq.s32.totalorder %s27, 1
      %p186 = por %p184, %p185
      %p188 = scmp.ne.s32.totalorder %s171, %s187
      %p189 = scmp.eq.s32.totalorder %s27, 0
      %p190 = por %p188, %p189
      %p191 = scmp.le.s32.totalorder 1, %s21
      %p192 = scmp.lt.s32.totalorder %s21, 3
      %p193 = pnand %p191, %p192
      %p194 = pneg %p193
      // Predicated region
      $region9: #{tpu_custom_call.1} parent=5 // pred_check
        _
      $region10: #{tpu_custom_call.1} parent=5 // pred_check_branch
        %196 = sbr.rel (%p193) target = $region12
      $region11: #{tpu_custom_call.1} parent=5 // pred_region
        %s197 = ssub.s32 %s21, 1
        // Predicated region
        $region13: #{tpu_custom_call.1} parent=11 // pred_check
          %p198 = pneg %p94
        $region14: #{tpu_custom_call.1} parent=11 // pred_check_branch
          %200 = sbr.rel (%p198) target = $region16
        $region15: #{tpu_custom_call.1} parent=11 // pred_region
          _
        $region16: #{tpu_custom_call.1} parent=11 // pred_fallthru
          _
        // Predicated region
        $region17: #{tpu_custom_call.1} parent=11 // pred_check
          %p201 = pneg %p115
        $region18: #{tpu_custom_call.1} parent=11 // pred_check_branch
          %203 = sbr.rel (%p201) target = $region20
        $region19: #{tpu_custom_call.1} parent=11 // pred_region
          _
        $region20: #{tpu_custom_call.1} parent=11 // pred_fallthru
          _
        // Predicated region
        $region21: #{tpu_custom_call.1} parent=11 // pred_check
          %p204 = pneg %p136
        $region22: #{tpu_custom_call.1} parent=11 // pred_check_branch
          %206 = sbr.rel (%p204) target = $region24
        $region23: #{tpu_custom_call.1} parent=11 // pred_region
          %s208 = ssub.s32 8192, 8192
          %209 = vsyncadd [#allocation6], %s208
          %s210 = sshll.u32 [#allocation7], 4
          %s211 = int_to_ptr.vmem [resolvable:$true] %s210
          %216 = dma.hbm_to_vmem [thread:$0]  %s4, 8192, %s211, [#allocation6], 128, 128, 8
        $region24: #{tpu_custom_call.1} parent=11 // pred_fallthru
          _
        // Predicated region
        $region25: #{tpu_custom_call.1} parent=11 // pred_check
          %p217 = pneg %p157
        $region26: #{tpu_custom_call.1} parent=11 // pred_check_branch
          %219 = sbr.rel (%p217) target = $region28
        $region27: #{tpu_custom_call.1} parent=11 // pred_region
          _
        $region28: #{tpu_custom_call.1} parent=11 // pred_fallthru
          _
      $region12: #{tpu_custom_call.1} parent=5 // pred_fallthru
        _
      %p220 = scmp.lt.s32.totalorder %s21, 2
      // Predicated region
      $region29: #{tpu_custom_call.1} parent=5 // pred_check
        %p221 = pneg %p220
      $region30: #{tpu_custom_call.1} parent=5 // pred_check_branch
        %223 = sbr.rel (%p221) target = $region32
      $region31: #{tpu_custom_call.1} parent=5 // pred_region
        // Predicated region
        $region33: #{tpu_custom_call.1} parent=31 // pred_check
          %p224 = pneg %p41
        $region34: #{tpu_custom_call.1} parent=31 // pred_check_branch
          %226 = sbr.rel (%p224) target = $region36
        $region35: #{tpu_custom_call.1} parent=31 // pred_region
          %s227 = sand.u32 %s31, 1
          %s228 = scalar_lea.sflag [#allocation3], %s227
          %s229 = sand.u32 %s31, 1
          %s230 = smul.addr %s229, 256
          %s231 = scalar_lea.vmem [#allocation2], %s230
          %s232 = smul.u32 4, %s21
          %s234 = ssub.s32 4096, 4096
          %235 = vsyncadd %s228, %s234
          %s236 = smul.addr %s232, 8
          %s237 = smul.addr %s236, 128
          %s238 = scalar_lea.hbm %s0, %s237
          %s239 = sshll.u32 %s231, 4
          %s240 = int_to_ptr.vmem [resolvable:$true] %s239
          %245 = dma.hbm_to_vmem [thread:$0]  %s238, 4096, %s240, %s228, 256, 256, 16
        $region36: #{tpu_custom_call.1} parent=31 // pred_fallthru
          _
        // Predicated region
        $region37: #{tpu_custom_call.1} parent=31 // pred_check
          %p246 = pneg %p67
        $region38: #{tpu_custom_call.1} parent=31 // pred_check_branch
          %248 = sbr.rel (%p246) target = $region40
        $region39: #{tpu_custom_call.1} parent=31 // pred_region
          %s249 = sand.u32 %s21, 1
          %s250 = scalar_lea.sflag [#allocation6], %s249
          %s251 = sand.u32 %s57, 1
          %s252 = smul.addr %s251, 256
          %s253 = scalar_lea.vmem [#allocation5], %s252
          %s254 = smul.u32 4, %s21
          %s256 = ssub.s32 4096, 4096
          %257 = vsyncadd %s250, %s256
          %s258 = smul.addr %s254, 8
          %s259 = smul.addr %s258, 128
          %s260 = scalar_lea.hbm %s1, %s259
          %s261 = sshll.u32 %s253, 4
          %s262 = int_to_ptr.vmem [resolvable:$true] %s261
          %267 = dma.hbm_to_vmem [thread:$0]  %s260, 4096, %s262, %s250, 256, 256, 16
        $region40: #{tpu_custom_call.1} parent=31 // pred_fallthru
          _
      $region32: #{tpu_custom_call.1} parent=5 // pred_fallthru
        _
      %p268 = scmp.le.s32.totalorder 1, %s21
      %p269 = scmp.lt.s32.totalorder %s21, 3
      %p270 = pnand %p268, %p269
      %p271 = pneg %p270
      // Predicated region
      $region41: #{tpu_custom_call.1} parent=5 // pred_check
        _
      $region42: #{tpu_custom_call.1} parent=5 // pred_check_branch
        %273 = sbr.rel (%p270) target = $region44
      $region43: #{tpu_custom_call.1} parent=5 // pred_region
        %s274 = ssub.s32 %s21, 1
        %s275 = sand.u32 %s34, 1
        %s276 = scalar_lea.sflag [#allocation3], %s275
        %s277 = sand.u32 %s34, 1
        %s278 = smul.addr %s277, 256
        %s279 = scalar_lea.vmem [#allocation2], %s278
        // Predicated region
        $region45: #{tpu_custom_call.1} parent=43 // pred_check
          %p280 = pneg %p47
        $region46: #{tpu_custom_call.1} parent=43 // pred_check_branch
          %282 = sbr.rel (%p280) target = $region48
        $region47: #{tpu_custom_call.1} parent=43 // pred_region
          %283 = dma.done %s276, 4096
        $region48: #{tpu_custom_call.1} parent=43 // pred_fallthru
          _
        %s284 = sand.u32 %s26, 1
        %s285 = scalar_lea.sflag [#allocation6], %s284
        %s286 = sand.u32 %s60, 1
        %s287 = smul.addr %s286, 256
        %s288 = scalar_lea.vmem [#allocation5], %s287
        // Predicated region
        $region49: #{tpu_custom_call.1} parent=43 // pred_check
          %p289 = pneg %p73
        $region50: #{tpu_custom_call.1} parent=43 // pred_check_branch
          %291 = sbr.rel (%p289) target = $region52
        $region51: #{tpu_custom_call.1} parent=43 // pred_region
          %292 = dma.done %s285, 4096
        $region52: #{tpu_custom_call.1} parent=43 // pred_fallthru
          _
        // Predicated region
        $region53: #{tpu_custom_call.1} parent=43 // pred_check
          %p293 = pneg %p136
        $region54: #{tpu_custom_call.1} parent=43 // pred_check_branch
          %295 = sbr.rel (%p293) target = $region56
        $region55: #{tpu_custom_call.1} parent=43 // pred_region
          %296 = dma.done [#allocation6], 8192
        $region56: #{tpu_custom_call.1} parent=43 // pred_fallthru
          _
        %s297 = sand.u32 %s34, 1
        %s298 = scalar_lea.sflag [#allocation3], %s297
        %s299 = sand.u32 %s34, 1
        %s300 = smul.addr %s299, 256
        %s301 = scalar_lea.vmem [#allocation2], %s300
        %p302 = pneg %p47
        %p303 = pneg %p44
        %s304 = sand.u32 %s26, 1
        %s305 = scalar_lea.sflag [#allocation6], %s304
        %s306 = sand.u32 %s60, 1
        %s307 = smul.addr %s306, 256
        %s308 = scalar_lea.vmem [#allocation5], %s307
        %p309 = pneg %p73
        %p310 = pneg %p70
        %p311 = pneg %p94
        %p312 = pneg %p91
        %p313 = pneg %p115
        %p314 = pneg %p112
        %p315 = pneg %p136
        %p316 = pneg %p133
        %p317 = pneg %p157
        %p318 = pneg %p154
        %p319 = pneg %p183
        %p320 = pneg %p180
        %s321 = sand.u32 %s170, 1
        %s322 = scalar_lea.sflag [#allocation4], %s321
        %s323 = sand.u32 %s170, 1
        %s324 = smul.addr %s323, 256
        %s325 = scalar_lea.vmem [#allocation8], %s324
        %s326 = smul.u32 4, %s26
        %s327 = smul.u32 4, %s26
        %s328 = smul.u32 4, %s26
        %v329 = vld [vmem:[%s279] sm:$0xff]
        %v330 = vld [vmem:[%s279 + $0x8] sm:$0xff]
        %v331 = vld [vmem:[%s279 + $0x10] sm:$0xff]
        %v332 = vld [vmem:[%s279 + $0x18] sm:$0xff]
        %v333 = vld [vmem:[%s279 + $0x20] sm:$0xff]
        %v334 = vld [vmem:[%s279 + $0x28] sm:$0xff]
        %v335 = vld [vmem:[%s279 + $0x30] sm:$0xff]
        %v336 = vld [vmem:[%s279 + $0x38] sm:$0xff]
        %v337 = vld [vmem:[%s279 + $0x40] sm:$0xff]
        %v338 = vld [vmem:[%s279 + $0x48] sm:$0xff]
        %v339 = vld [vmem:[%s279 + $0x50] sm:$0xff]
        %v340 = vld [vmem:[%s279 + $0x58] sm:$0xff]
        %v341 = vld [vmem:[%s279 + $0x60] sm:$0xff]
        %v342 = vld [vmem:[%s279 + $0x68] sm:$0xff]
        %v343 = vld [vmem:[%s279 + $0x70] sm:$0xff]
        %v344 = vld [vmem:[%s279 + $0x78] sm:$0xff]
        %v345 = vld [vmem:[%s279 + $0x80] sm:$0xff]
        %v346 = vld [vmem:[%s279 + $0x88] sm:$0xff]
        %v347 = vld [vmem:[%s279 + $0x90] sm:$0xff]
        %v348 = vld [vmem:[%s279 + $0x98] sm:$0xff]
        %v349 = vld [vmem:[%s279 + $0xa0] sm:$0xff]
        %v350 = vld [vmem:[%s279 + $0xa8] sm:$0xff]
        %v351 = vld [vmem:[%s279 + $0xb0] sm:$0xff]
        %v352 = vld [vmem:[%s279 + $0xb8] sm:$0xff]
        %v353 = vld [vmem:[%s279 + $0xc0] sm:$0xff]
        %v354 = vld [vmem:[%s279 + $0xc8] sm:$0xff]
        %v355 = vld [vmem:[%s279 + $0xd0] sm:$0xff]
        %v356 = vld [vmem:[%s279 + $0xd8] sm:$0xff]
        %v357 = vld [vmem:[%s279 + $0xe0] sm:$0xff]
        %v358 = vld [vmem:[%s279 + $0xe8] sm:$0xff]
        %v359 = vld [vmem:[%s279 + $0xf0] sm:$0xff]
        %v360 = vld [vmem:[%s279 + $0xf8] sm:$0xff]
        %v361 = vadd.f32 %v329, %v330
        %362 = vadd.xlane.f32.xlu0 %v361
        %v363 = vpop.xlane.xlu0 %362
        %v364 = vadd.f32 %v331, %v332
        %365 = vadd.xlane.f32.xlu0 %v364
        %v366 = vpop.xlane.xlu0 %365
        %v367 = vadd.f32 %v333, %v334
        %368 = vadd.xlane.f32.xlu0 %v367
        %v369 = vpop.xlane.xlu0 %368
        %v370 = vadd.f32 %v335, %v336
        %371 = vadd.xlane.f32.xlu0 %v370
        %v372 = vpop.xlane.xlu0 %371
        %v373 = vadd.f32 %v337, %v338
        %374 = vadd.xlane.f32.xlu0 %v373
        %v375 = vpop.xlane.xlu0 %374
        %v376 = vadd.f32 %v339, %v340
        %377 = vadd.xlane.f32.xlu0 %v376
        %v378 = vpop.xlane.xlu0 %377
        %v379 = vadd.f32 %v341, %v342
        %380 = vadd.xlane.f32.xlu0 %v379
        %v381 = vpop.xlane.xlu0 %380
        %v382 = vadd.f32 %v343, %v344
        %383 = vadd.xlane.f32.xlu0 %v382
        %v384 = vpop.xlane.xlu0 %383
        %v385 = vadd.f32 %v345, %v346
        %386 = vadd.xlane.f32.xlu0 %v385
        %v387 = vpop.xlane.xlu0 %386
        %v388 = vadd.f32 %v347, %v348
        %389 = vadd.xlane.f32.xlu0 %v388
        %v390 = vpop.xlane.xlu0 %389
        %v391 = vadd.f32 %v349, %v350
        %392 = vadd.xlane.f32.xlu0 %v391
        %v393 = vpop.xlane.xlu0 %392
        %v394 = vadd.f32 %v351, %v352
        %395 = vadd.xlane.f32.xlu0 %v394
        %v396 = vpop.xlane.xlu0 %395
        %v397 = vadd.f32 %v353, %v354
        %398 = vadd.xlane.f32.xlu0 %v397
        %v399 = vpop.xlane.xlu0 %398
        %v400 = vadd.f32 %v355, %v356
        %401 = vadd.xlane.f32.xlu0 %v400
        %v402 = vpop.xlane.xlu0 %401
        %v403 = vadd.f32 %v357, %v358
        %404 = vadd.xlane.f32.xlu0 %v403
        %v405 = vpop.xlane.xlu0 %404
        %v406 = vadd.f32 %v359, %v360
        %407 = vadd.xlane.f32.xlu0 %v406
        %v408 = vpop.xlane.xlu0 %407
        %v409 = vrcp.pop 256.0
        %v410 = vmul.f32 %v363, %v409
        %v411 = vmul.f32 %v366, %v409
        %v412 = vmul.f32 %v369, %v409
        %v413 = vmul.f32 %v372, %v409
        %v414 = vmul.f32 %v375, %v409
        %v415 = vmul.f32 %v378, %v409
        %v416 = vmul.f32 %v381, %v409
        %v417 = vmul.f32 %v384, %v409
        %v418 = vmul.f32 %v387, %v409
        %v419 = vmul.f32 %v390, %v409
        %v420 = vmul.f32 %v393, %v409
        %v421 = vmul.f32 %v396, %v409
        %v422 = vmul.f32 %v399, %v409
        %v423 = vmul.f32 %v402, %v409
        %v424 = vmul.f32 %v405, %v409
        %v425 = vmul.f32 %v408, %v409
        %v426 = vmax.f32 %v329, %v330
        %427 = vmax.xlane.f32.xlu0 %v426
        %v428 = vpop.xlane.xlu0 %427
        %v429 = vmax.f32 %v331, %v332
        %430 = vmax.xlane.f32.xlu0 %v429
        %v431 = vpop.xlane.xlu0 %430
        %v432 = vmax.f32 %v333, %v334
        %433 = vmax.xlane.f32.xlu0 %v432
        %v434 = vpop.xlane.xlu0 %433
        %v435 = vmax.f32 %v335, %v336
        %436 = vmax.xlane.f32.xlu0 %v435
        %v437 = vpop.xlane.xlu0 %436
        %v438 = vmax.f32 %v337, %v338
        %439 = vmax.xlane.f32.xlu0 %v438
        %v440 = vpop.xlane.xlu0 %439
        %v441 = vmax.f32 %v339, %v340
        %442 = vmax.xlane.f32.xlu0 %v441
        %v443 = vpop.xlane.xlu0 %442
        %v444 = vmax.f32 %v341, %v342
        %445 = vmax.xlane.f32.xlu0 %v444
        %v446 = vpop.xlane.xlu0 %445
        %v447 = vmax.f32 %v343, %v344
        %448 = vmax.xlane.f32.xlu0 %v447
        %v449 = vpop.xlane.xlu0 %448
        %v450 = vmax.f32 %v345, %v346
        %451 = vmax.xlane.f32.xlu0 %v450
        %v452 = vpop.xlane.xlu0 %451
        %v453 = vmax.f32 %v347, %v348
        %454 = vmax.xlane.f32.xlu0 %v453
        %v455 = vpop.xlane.xlu0 %454
        %v456 = vmax.f32 %v349, %v350
        %457 = vmax.xlane.f32.xlu0 %v456
        %v458 = vpop.xlane.xlu0 %457
        %v459 = vmax.f32 %v351, %v352
        %460 = vmax.xlane.f32.xlu0 %v459
        %v461 = vpop.xlane.xlu0 %460
        %v462 = vmax.f32 %v353, %v354
        %463 = vmax.xlane.f32.xlu0 %v462
        %v464 = vpop.xlane.xlu0 %463
        %v465 = vmax.f32 %v355, %v356
        %466 = vmax.xlane.f32.xlu0 %v465
        %v467 = vpop.xlane.xlu0 %466
        %v468 = vmax.f32 %v357, %v358
        %469 = vmax.xlane.f32.xlu0 %v468
        %v470 = vpop.xlane.xlu0 %469
        %v471 = vmax.f32 %v359, %v360
        %472 = vmax.xlane.f32.xlu0 %v471
        %v473 = vpop.xlane.xlu0 %472
        %v474 = vadd.f32 %v329, %v331
        %v475 = vadd.f32 %v474, %v333
        %v476 = vadd.f32 %v475, %v335
        %v477 = vrot.slane %v476, 4
        %v478 = vadd.f32 %v476, %v477
        %v479 = vrot.slane %v478, 2
        %v480 = vadd.f32 %v478, %v479
        %v481 = vrot.slane %v480, 1
        %v482 = vadd.f32 %v480, %v481
        %v483 = vadd.f32 %v330, %v332
        %v484 = vadd.f32 %v483, %v334
        %v485 = vadd.f32 %v484, %v336
        %v486 = vrot.slane %v485, 4
        %v487 = vadd.f32 %v485, %v486
        %v488 = vrot.slane %v487, 2
        %v489 = vadd.f32 %v487, %v488
        %v490 = vrot.slane %v489, 1
        %v491 = vadd.f32 %v489, %v490
        %v492 = vadd.f32 %v337, %v339
        %v493 = vadd.f32 %v492, %v341
        %v494 = vadd.f32 %v493, %v343
        %v495 = vrot.slane %v494, 4
        %v496 = vadd.f32 %v494, %v495
        %v497 = vrot.slane %v496, 2
        %v498 = vadd.f32 %v496, %v497
        %v499 = vrot.slane %v498, 1
        %v500 = vadd.f32 %v498, %v499
        %v501 = vadd.f32 %v338, %v340
        %v502 = vadd.f32 %v501, %v342
        %v503 = vadd.f32 %v502, %v344
        %v504 = vrot.slane %v503, 4
        %v505 = vadd.f32 %v503, %v504
        %v506 = vrot.slane %v505, 2
        %v507 = vadd.f32 %v505, %v506
        %v508 = vrot.slane %v507, 1
        %v509 = vadd.f32 %v507, %v508
        %v510 = vadd.f32 %v345, %v347
        %v511 = vadd.f32 %v510, %v349
        %v512 = vadd.f32 %v511, %v351
        %v513 = vrot.slane %v512, 4
        %v514 = vadd.f32 %v512, %v513
        %v515 = vrot.slane %v514, 2
        %v516 = vadd.f32 %v514, %v515
        %v517 = vrot.slane %v516, 1
        %v518 = vadd.f32 %v516, %v517
        %v519 = vadd.f32 %v346, %v348
        %v520 = vadd.f32 %v519, %v350
        %v521 = vadd.f32 %v520, %v352
        %v522 = vrot.slane %v521, 4
        %v523 = vadd.f32 %v521, %v522
        %v524 = vrot.slane %v523, 2
        %v525 = vadd.f32 %v523, %v524
        %v526 = vrot.slane %v525, 1
        %v527 = vadd.f32 %v525, %v526
        %v528 = vadd.f32 %v353, %v355
        %v529 = vadd.f32 %v528, %v357
        %v530 = vadd.f32 %v529, %v359
        %v531 = vrot.slane %v530, 4
        %v532 = vadd.f32 %v530, %v531
        %v533 = vrot.slane %v532, 2
        %v534 = vadd.f32 %v532, %v533
        %v535 = vrot.slane %v534, 1
        %v536 = vadd.f32 %v534, %v535
        %v537 = vadd.f32 %v354, %v356
        %v538 = vadd.f32 %v537, %v358
        %v539 = vadd.f32 %v538, %v360
        %v540 = vrot.slane %v539, 4
        %v541 = vadd.f32 %v539, %v540
        %v542 = vrot.slane %v541, 2
        %v543 = vadd.f32 %v541, %v542
        %v544 = vrot.slane %v543, 1
        %v545 = vadd.f32 %v543, %v544
        %v546 = vrcp.pop 32.0
        %v547 = vmul.f32 %v482, %v546
        %v548 = vmul.f32 %v491, %v546
        %v549 = vmul.f32 %v500, %v546
        %v550 = vmul.f32 %v509, %v546
        %v551 = vmul.f32 %v518, %v546
        %v552 = vmul.f32 %v527, %v546
        %v553 = vmul.f32 %v536, %v546
        %v554 = vmul.f32 %v545, %v546
        %v555 = vmax.f32 %v329, %v331
        %v556 = vmax.f32 %v555, %v333
        %v557 = vmax.f32 %v556, %v335
        %v558 = vrot.slane %v557, 4
        %v559 = vmax.f32 %v557, %v558
        %v560 = vrot.slane %v559, 2
        %v561 = vmax.f32 %v559, %v560
        %v562 = vrot.slane %v561, 1
        %v563 = vmax.f32 %v561, %v562
        %v564 = vmax.f32 %v330, %v332
        %v565 = vmax.f32 %v564, %v334
        %v566 = vmax.f32 %v565, %v336
        %v567 = vrot.slane %v566, 4
        %v568 = vmax.f32 %v566, %v567
        %v569 = vrot.slane %v568, 2
        %v570 = vmax.f32 %v568, %v569
        %v571 = vrot.slane %v570, 1
        %v572 = vmax.f32 %v570, %v571
        %v573 = vmax.f32 %v337, %v339
        %v574 = vmax.f32 %v573, %v341
        %v575 = vmax.f32 %v574, %v343
        %v576 = vrot.slane %v575, 4
        %v577 = vmax.f32 %v575, %v576
        %v578 = vrot.slane %v577, 2
        %v579 = vmax.f32 %v577, %v578
        %v580 = vrot.slane %v579, 1
        %v581 = vmax.f32 %v579, %v580
        %v582 = vmax.f32 %v338, %v340
        %v583 = vmax.f32 %v582, %v342
        %v584 = vmax.f32 %v583, %v344
        %v585 = vrot.slane %v584, 4
        %v586 = vmax.f32 %v584, %v585
        %v587 = vrot.slane %v586, 2
        %v588 = vmax.f32 %v586, %v587
        %v589 = vrot.slane %v588, 1
        %v590 = vmax.f32 %v588, %v589
        %v591 = vmax.f32 %v345, %v347
        %v592 = vmax.f32 %v591, %v349
        %v593 = vmax.f32 %v592, %v351
        %v594 = vrot.slane %v593, 4
        %v595 = vmax.f32 %v593, %v594
        %v596 = vrot.slane %v595, 2
        %v597 = vmax.f32 %v595, %v596
        %v598 = vrot.slane %v597, 1
        %v599 = vmax.f32 %v597, %v598
        %v600 = vmax.f32 %v346, %v348
        %v601 = vmax.f32 %v600, %v350
        %v602 = vmax.f32 %v601, %v352
        %v603 = vrot.slane %v602, 4
        %v604 = vmax.f32 %v602, %v603
        %v605 = vrot.slane %v604, 2
        %v606 = vmax.f32 %v604, %v605
        %v607 = vrot.slane %v606, 1
        %v608 = vmax.f32 %v606, %v607
        %v609 = vmax.f32 %v353, %v355
        %v610 = vmax.f32 %v609, %v357
        %v611 = vmax.f32 %v610, %v359
        %v612 = vrot.slane %v611, 4
        %v613 = vmax.f32 %v611, %v612
        %v614 = vrot.slane %v613, 2
        %v615 = vmax.f32 %v613, %v614
        %v616 = vrot.slane %v615, 1
        %v617 = vmax.f32 %v615, %v616
        %v618 = vmax.f32 %v354, %v356
        %v619 = vmax.f32 %v618, %v358
        %v620 = vmax.f32 %v619, %v360
        %v621 = vrot.slane %v620, 4
        %v622 = vmax.f32 %v620, %v621
        %v623 = vrot.slane %v622, 2
        %v624 = vmax.f32 %v622, %v623
        %v625 = vrot.slane %v624, 1
        %v626 = vmax.f32 %v624, %v625
        %v643 = vlaneseq
        %v644 = vand.u32 %v643, 127
        %v645 = vlaneseq
        %v646 = vshrl.u32 %v645, 7
        %v647 = vsub.s32 %v644, %v646
        %v648 = vrot.slane %v410, %v647
        %v649 = vadd.s32 %v644, 4294967288
        %v650 = vlaneseq
        %v651 = vshrl.u32 %v650, 7
        %v652 = vsub.s32 %v649, %v651
        %v653 = vrot.slane %v411, %v652
        %vm654 = vcmask 130112
        %v655 = vsel %vm654, %v653, %v648
        %v656 = vadd.s32 %v644, 4294967280
        %v657 = vlaneseq
        %v658 = vshrl.u32 %v657, 7
        %v659 = vsub.s32 %v656, %v658
        %v660 = vrot.slane %v412, %v659
        %vm661 = vcmask 195712
        %v662 = vsel %vm661, %v660, %v655
        %v663 = vadd.s32 %v644, 4294967272
        %v664 = vlaneseq
        %v665 = vshrl.u32 %v664, 7
        %v666 = vsub.s32 %v663, %v665
        %v667 = vrot.slane %v413, %v666
        %vm668 = vcmask 261312
        %v669 = vsel %vm668, %v667, %v662
        %v670 = vlaneseq
        %v671 = vshrl.u32 %v670, 7
        %v672 = vsub.s32 %v644, %v671
        %v673 = vrot.slane %v414, %v672
        %v674 = vlaneseq
        %v675 = vshrl.u32 %v674, 7
        %v676 = vsub.s32 %v649, %v675
        %v677 = vrot.slane %v415, %v676
        %v678 = vsel %vm654, %v677, %v673
        %v679 = vlaneseq
        %v680 = vshrl.u32 %v679, 7
        %v681 = vsub.s32 %v656, %v680
        %v682 = vrot.slane %v416, %v681
        %v683 = vsel %vm661, %v682, %v678
        %v684 = vlaneseq
        %v685 = vshrl.u32 %v684, 7
        %v686 = vsub.s32 %v663, %v685
        %v687 = vrot.slane %v417, %v686
        %v688 = vsel %vm668, %v687, %v683
        %v689 = vlaneseq
        %v690 = vshrl.u32 %v689, 7
        %v691 = vsub.s32 %v644, %v690
        %v692 = vrot.slane %v418, %v691
        %v693 = vlaneseq
        %v694 = vshrl.u32 %v693, 7
        %v695 = vsub.s32 %v649, %v694
        %v696 = vrot.slane %v419, %v695
        %v697 = vsel %vm654, %v696, %v692
        %v698 = vlaneseq
        %v699 = vshrl.u32 %v698, 7
        %v700 = vsub.s32 %v656, %v699
        %v701 = vrot.slane %v420, %v700
        %v702 = vsel %vm661, %v701, %v697
        %v703 = vlaneseq
        %v704 = vshrl.u32 %v703, 7
        %v705 = vsub.s32 %v663, %v704
        %v706 = vrot.slane %v421, %v705
        %v707 = vsel %vm668, %v706, %v702
        %v708 = vlaneseq
        %v709 = vshrl.u32 %v708, 7
        %v710 = vsub.s32 %v644, %v709
        %v711 = vrot.slane %v422, %v710
        %v712 = vlaneseq
        %v713 = vshrl.u32 %v712, 7
        %v714 = vsub.s32 %v649, %v713
        %v715 = vrot.slane %v423, %v714
        %v716 = vsel %vm654, %v715, %v711
        %v717 = vlaneseq
        %v718 = vshrl.u32 %v717, 7
        %v719 = vsub.s32 %v656, %v718
        %v720 = vrot.slane %v424, %v719
        %v721 = vsel %vm661, %v720, %v716
        %v722 = vlaneseq
        %v723 = vshrl.u32 %v722, 7
        %v724 = vsub.s32 %v663, %v723
        %v725 = vrot.slane %v425, %v724
        %v726 = vsel %vm668, %v725, %v721
        %vm727 = vcmask 1041409
        %v728 = vsel %vm727, %v688, %v669
        %vm729 = vcmask 1042434
        %v730 = vsel %vm729, %v707, %v728
        %vm731 = vcmask 1043459
        %v732 = vsel %vm731, %v726, %v730
        %v750 = vlaneseq
        %v751 = vshrl.u32 %v750, 7
        %v752 = vsub.s32 %v644, %v751
        %v753 = vrot.slane %v428, %v752
        %v754 = vlaneseq
        %v755 = vshrl.u32 %v754, 7
        %v756 = vsub.s32 %v649, %v755
        %v757 = vrot.slane %v431, %v756
        %v758 = vsel %vm654, %v757, %v753
        %v759 = vlaneseq
        %v760 = vshrl.u32 %v759, 7
        %v761 = vsub.s32 %v656, %v760
        %v762 = vrot.slane %v434, %v761
        %v763 = vsel %vm661, %v762, %v758
        %v764 = vlaneseq
        %v765 = vshrl.u32 %v764, 7
        %v766 = vsub.s32 %v663, %v765
        %v767 = vrot.slane %v437, %v766
        %v768 = vsel %vm668, %v767, %v763
        %v769 = vlaneseq
        %v770 = vshrl.u32 %v769, 7
        %v771 = vsub.s32 %v644, %v770
        %v772 = vrot.slane %v440, %v771
        %v773 = vlaneseq
        %v774 = vshrl.u32 %v773, 7
        %v775 = vsub.s32 %v649, %v774
        %v776 = vrot.slane %v443, %v775
        %v777 = vsel %vm654, %v776, %v772
        %v778 = vlaneseq
        %v779 = vshrl.u32 %v778, 7
        %v780 = vsub.s32 %v656, %v779
        %v781 = vrot.slane %v446, %v780
        %v782 = vsel %vm661, %v781, %v777
        %v783 = vlaneseq
        %v784 = vshrl.u32 %v783, 7
        %v785 = vsub.s32 %v663, %v784
        %v786 = vrot.slane %v449, %v785
        %v787 = vsel %vm668, %v786, %v782
        %v788 = vlaneseq
        %v789 = vshrl.u32 %v788, 7
        %v790 = vsub.s32 %v644, %v789
        %v791 = vrot.slane %v452, %v790
        %v792 = vlaneseq
        %v793 = vshrl.u32 %v792, 7
        %v794 = vsub.s32 %v649, %v793
        %v795 = vrot.slane %v455, %v794
        %v796 = vsel %vm654, %v795, %v791
        %v797 = vlaneseq
        %v798 = vshrl.u32 %v797, 7
        %v799 = vsub.s32 %v656, %v798
        %v800 = vrot.slane %v458, %v799
        %v801 = vsel %vm661, %v800, %v796
        %v802 = vlaneseq
        %v803 = vshrl.u32 %v802, 7
        %v804 = vsub.s32 %v663, %v803
        %v805 = vrot.slane %v461, %v804
        %v806 = vsel %vm668, %v805, %v801
        %v807 = vlaneseq
        %v808 = vshrl.u32 %v807, 7
        %v809 = vsub.s32 %v644, %v808
        %v810 = vrot.slane %v464, %v809
        %v811 = vlaneseq
        %v812 = vshrl.u32 %v811, 7
        %v813 = vsub.s32 %v649, %v812
        %v814 = vrot.slane %v467, %v813
        %v815 = vsel %vm654, %v814, %v810
        %v816 = vlaneseq
        %v817 = vshrl.u32 %v816, 7
        %v818 = vsub.s32 %v656, %v817
        %v819 = vrot.slane %v470, %v818
        %v820 = vsel %vm661, %v819, %v815
        %v821 = vlaneseq
        %v822 = vshrl.u32 %v821, 7
        %v823 = vsub.s32 %v663, %v822
        %v824 = vrot.slane %v473, %v823
        %v825 = vsel %vm668, %v824, %v820
        %vm826 = vcmask 1045509
        %v827 = vsel %vm826, %v787, %v768
        %vm828 = vcmask 1046534
        %v829 = vsel %vm828, %v806, %v827
        %vm830 = vcmask 1047559
        %v831 = vsel %vm830, %v825, %v829
        %vm833 = vcmask 1043456
        %v834 = vsel %vm833, %v732, %v831
        %v835 = vld [vmem:[%s2] sm:$0xff]
        %v836 = vld [vmem:[%s2 + $0x8] sm:$0xff]
        %v837 = vld [vmem:[%s2 + $0x10] sm:$0xff]
        %v838 = vld [vmem:[%s2 + $0x18] sm:$0xff]
        %vm839 = vcmask 261120
        %v841 = vsel %vm839, %v834, 0
        %843 = vmatprep.subr.mxu0 0.0
        %844 = vmatpush1.msra.mxu0 0.0
        %845 = vmatprep.subr.mxu0 0.0
        %846 = vmatpush1.msra.mxu0 0.0
        %847 = vmatprep.subr.mxu0 0.0
        %848 = vmatpush1.msra.mxu0 0.0
        %849 = vmatprep.subr.mxu0 0.0
        %850 = vmatpush1.msra.mxu0 0.0
        %851 = vmatprep.subr.mxu0 0.0
        %852 = vmatpush1.msra.mxu0 0.0
        %853 = vmatprep.subr.mxu0 0.0
        %854 = vmatpush1.msra.mxu0 0.0
        %855 = vmatprep.subr.mxu0 0.0
        %856 = vmatpush1.msra.mxu0 0.0
        %857 = vmatprep.subr.mxu0 0.0
        %858 = vmatpush1.msra.mxu0 0.0
        %859 = vmatprep.subr.mxu0 0.0
        %860 = vmatpush1.msra.mxu0 0.0
        %861 = vmatprep.subr.mxu0 0.0
        %862 = vmatpush1.msra.mxu0 0.0
        %863 = vmatprep.subr.mxu0 0.0
        %864 = vmatpush1.msra.mxu0 0.0
        %865 = vmatprep.subr.mxu0 0.0
        %866 = vmatpush1.msra.mxu0 0.0
        %867 = vmatprep.subr.mxu0 0.0
        %868 = vmatpush1.msra.mxu0 %v838
        %869 = vmatprep.subr.mxu0 0.0
        %870 = vmatpush1.msra.mxu0 %v837
        %871 = vmatprep.subr.mxu0 0.0
        %872 = vmatpush1.msra.mxu0 %v836
        %873 = vmatprep.subr.mxu0 0.0
        %874 = vmatpush1.msra.mxu0 %v835
        %875 = vmatprep.subr.mxu0 0.0
        %876 = vmatpush2.msra.mxu0 0.0
        %877 = vmatprep.subr.mxu0 0.0
        %878 = vmatpush2.msra.mxu0 0.0
        %879 = vmatprep.subr.mxu0 0.0
        %880 = vmatpush2.msra.mxu0 0.0
        %881 = vmatprep.subr.mxu0 0.0
        %882 = vmatpush2.msra.mxu0 0.0
        %883 = vmatprep.subr.mxu0 0.0
        %884 = vmatpush2.msra.mxu0 0.0
        %885 = vmatprep.subr.mxu0 0.0
        %886 = vmatpush2.msra.mxu0 0.0
        %887 = vmatprep.subr.mxu0 0.0
        %888 = vmatpush2.msra.mxu0 0.0
        %889 = vmatprep.subr.mxu0 0.0
        %890 = vmatpush2.msra.mxu0 0.0
        %891 = vmatprep.subr.mxu0 0.0
        %892 = vmatpush2.msra.mxu0 0.0
        %893 = vmatprep.subr.mxu0 0.0
        %894 = vmatpush2.msra.mxu0 0.0
        %895 = vmatprep.subr.mxu0 0.0
        %896 = vmatpush2.msra.mxu0 0.0
        %897 = vmatprep.subr.mxu0 0.0
        %898 = vmatpush2.msra.mxu0 0.0
        %899 = vmatprep.subr.mxu0 0.0
        %900 = vmatpush2.msra.mxu0 0.0
        %901 = vmatprep.subr.mxu0 0.0
        %902 = vmatpush2.msra.mxu0 0.0
        %903 = vmatprep.subr.mxu0 0.0
        %904 = vmatpush2.msra.mxu0 0.0
        %905 = vmatprep.subr.mxu0 0.0
        %906 = vmatpush2.msra.mxu0 0.0
        %907 = vmatprep.mubr.f32.mxu0 0.0
        %908 = vmatmul.mubr.f32.gmra.mxu0 %v841
        %v909 = vpop.f32.mrf.mxu0
        %v910 = vadd.f32 0.0, %v909
        %v911 = vpop.f32.mrf.mxu0
        %912 = vdwg.mxu0
        %v913 = vmax.f32 %v910, 0.0
        %v915 = vrot.slane %v913, 4
        %v917 = vadd.f32 %v913, %v915
        %v918 = vld [vmem:[%s3] sm:$0xff]
        %vm919 = vcmask 64512
        %v921 = vsel %vm919, %v917, 0
        %923 = vmatprep.subr.mxu0 0.0
        %924 = vmatpush1.msra.mxu0 0.0
        %925 = vmatprep.subr.mxu0 0.0
        %926 = vmatpush1.msra.mxu0 0.0
        %927 = vmatprep.subr.mxu0 0.0
        %928 = vmatpush1.msra.mxu0 0.0
        %929 = vmatprep.subr.mxu0 0.0
        %930 = vmatpush1.msra.mxu0 0.0
        %931 = vmatprep.subr.mxu0 0.0
        %932 = vmatpush1.msra.mxu0 0.0
        %933 = vmatprep.subr.mxu0 0.0
        %934 = vmatpush1.msra.mxu0 0.0
        %935 = vmatprep.subr.mxu0 0.0
        %936 = vmatpush1.msra.mxu0 0.0
        %937 = vmatprep.subr.mxu0 0.0
        %938 = vmatpush1.msra.mxu0 0.0
        %939 = vmatprep.subr.mxu0 0.0
        %940 = vmatpush1.msra.mxu0 0.0
        %941 = vmatprep.subr.mxu0 0.0
        %942 = vmatpush1.msra.mxu0 0.0
        %943 = vmatprep.subr.mxu0 0.0
        %944 = vmatpush1.msra.mxu0 0.0
        %945 = vmatprep.subr.mxu0 0.0
        %946 = vmatpush1.msra.mxu0 0.0
        %947 = vmatprep.subr.mxu0 0.0
        %948 = vmatpush1.msra.mxu0 0.0
        %949 = vmatprep.subr.mxu0 0.0
        %950 = vmatpush1.msra.mxu0 0.0
        %951 = vmatprep.subr.mxu0 0.0
        %952 = vmatpush1.msra.mxu0 0.0
        %953 = vmatprep.subr.mxu0 0.0
        %954 = vmatpush1.msra.mxu0 %v918
        %955 = vmatprep.subr.mxu0 0.0
        %956 = vmatpush2.msra.mxu0 0.0
        %957 = vmatprep.subr.mxu0 0.0
        %958 = vmatpush2.msra.mxu0 0.0
        %959 = vmatprep.subr.mxu0 0.0
        %960 = vmatpush2.msra.mxu0 0.0
        %961 = vmatprep.subr.mxu0 0.0
        %962 = vmatpush2.msra.mxu0 0.0
        %963 = vmatprep.subr.mxu0 0.0
        %964 = vmatpush2.msra.mxu0 0.0
        %965 = vmatprep.subr.mxu0 0.0
        %966 = vmatpush2.msra.mxu0 0.0
        %967 = vmatprep.subr.mxu0 0.0
        %968 = vmatpush2.msra.mxu0 0.0
        %969 = vmatprep.subr.mxu0 0.0
        %970 = vmatpush2.msra.mxu0 0.0
        %971 = vmatprep.subr.mxu0 0.0
        %972 = vmatpush2.msra.mxu0 0.0
        %973 = vmatprep.subr.mxu0 0.0
        %974 = vmatpush2.msra.mxu0 0.0
        %975 = vmatprep.subr.mxu0 0.0
        %976 = vmatpush2.msra.mxu0 0.0
        %977 = vmatprep.subr.mxu0 0.0
        %978 = vmatpush2.msra.mxu0 0.0
        %979 = vmatprep.subr.mxu0 0.0
        %980 = vmatpush2.msra.mxu0 0.0
        %981 = vmatprep.subr.mxu0 0.0
        %982 = vmatpush2.msra.mxu0 0.0
        %983 = vmatprep.subr.mxu0 0.0
        %984 = vmatpush2.msra.mxu0 0.0
        %985 = vmatprep.subr.mxu0 0.0
        %986 = vmatpush2.msra.mxu0 0.0
        %987 = vmatprep.mubr.f32.mxu0 0.0
        %988 = vmatmul.mubr.f32.gmra.mxu0 %v921
        %v989 = vpop.f32.mrf.mxu0
        %v990 = vadd.f32 0.0, %v989
        %v991 = vpop.f32.mrf.mxu0
        %992 = vdwg.mxu0
        %v1001 = vsel %vm727, %v549, %v547
        %v1002 = vsel %vm729, %v551, %v1001
        %v1003 = vsel %vm731, %v553, %v1002
        %v1004 = vsel %vm727, %v550, %v548
        %v1005 = vsel %vm729, %v552, %v1004
        %v1006 = vsel %vm731, %v554, %v1005
        %v1017 = vsel %vm727, %v581, %v563
        %v1018 = vsel %vm729, %v599, %v1017
        %v1019 = vsel %vm731, %v617, %v1018
        %v1020 = vsel %vm727, %v590, %v572
        %v1021 = vsel %vm729, %v608, %v1020
        %v1022 = vsel %vm731, %v626, %v1021
        %v1025 = vpack.c.bf16 %v1003, %v1003
        %v1026 = vpack.c.bf16 %v1006, %v1006
        %v1027 = vpack.c.bf16 %v1019, %v1019
        %v1028 = vpack.c.bf16 %v1022, %v1022
        %v1029 = vld [vmem:[#allocation7] sm:$0xff]
        %v1030 = vld [vmem:[#allocation7 + $0x8] sm:$0xff]
        %v1031 = vld [vmem:[#allocation7 + $0x10] sm:$0xff]
        %v1032 = vld [vmem:[#allocation7 + $0x18] sm:$0xff]
        %v1033 = vld [vmem:[#allocation7 + $0x20] sm:$0xff]
        %v1034 = vld [vmem:[#allocation7 + $0x28] sm:$0xff]
        %v1035 = vld [vmem:[#allocation7 + $0x30] sm:$0xff]
        %v1036 = vld [vmem:[#allocation7 + $0x38] sm:$0xff]
        %v1037 = vld [vmem:[#allocation7 + $0x40] sm:$0xff]
        %v1038 = vld [vmem:[#allocation7 + $0x48] sm:$0xff]
        %v1039 = vld [vmem:[#allocation7 + $0x50] sm:$0xff]
        %v1040 = vld [vmem:[#allocation7 + $0x58] sm:$0xff]
        %v1041 = vld [vmem:[#allocation7 + $0x60] sm:$0xff]
        %v1042 = vld [vmem:[#allocation7 + $0x68] sm:$0xff]
        %v1043 = vld [vmem:[#allocation7 + $0x70] sm:$0xff]
        %v1044 = vld [vmem:[#allocation7 + $0x78] sm:$0xff]
        %v1045 = vld [vmem:[#allocation7 + $0x80] sm:$0xff]
        %v1046 = vld [vmem:[#allocation7 + $0x88] sm:$0xff]
        %v1047 = vld [vmem:[#allocation7 + $0x90] sm:$0xff]
        %v1048 = vld [vmem:[#allocation7 + $0x98] sm:$0xff]
        %v1049 = vld [vmem:[#allocation7 + $0xa0] sm:$0xff]
        %v1050 = vld [vmem:[#allocation7 + $0xa8] sm:$0xff]
        %v1051 = vld [vmem:[#allocation7 + $0xb0] sm:$0xff]
        %v1052 = vld [vmem:[#allocation7 + $0xb8] sm:$0xff]
        %v1053 = vld [vmem:[#allocation7 + $0xc0] sm:$0xff]
        %v1054 = vld [vmem:[#allocation7 + $0xc8] sm:$0xff]
        %v1055 = vld [vmem:[#allocation7 + $0xd0] sm:$0xff]
        %v1056 = vld [vmem:[#allocation7 + $0xd8] sm:$0xff]
        %v1057 = vld [vmem:[#allocation7 + $0xe0] sm:$0xff]
        %v1058 = vld [vmem:[#allocation7 + $0xe8] sm:$0xff]
        %v1059 = vld [vmem:[#allocation7 + $0xf0] sm:$0xff]
        %v1060 = vld [vmem:[#allocation7 + $0xf8] sm:$0xff]
        %v1061 = vld [vmem:[#allocation7 + $0x100] sm:$0xff]
        %v1062 = vld [vmem:[#allocation7 + $0x108] sm:$0xff]
        %v1063 = vld [vmem:[#allocation7 + $0x110] sm:$0xff]
        %v1064 = vld [vmem:[#allocation7 + $0x118] sm:$0xff]
        %v1065 = vld [vmem:[#allocation7 + $0x120] sm:$0xff]
        %v1066 = vld [vmem:[#allocation7 + $0x128] sm:$0xff]
        %v1067 = vld [vmem:[#allocation7 + $0x130] sm:$0xff]
        %v1068 = vld [vmem:[#allocation7 + $0x138] sm:$0xff]
        %v1069 = vld [vmem:[#allocation7 + $0x140] sm:$0xff]
        %v1070 = vld [vmem:[#allocation7 + $0x148] sm:$0xff]
        %v1071 = vld [vmem:[#allocation7 + $0x150] sm:$0xff]
        %v1072 = vld [vmem:[#allocation7 + $0x158] sm:$0xff]
        %v1073 = vld [vmem:[#allocation7 + $0x160] sm:$0xff]
        %v1074 = vld [vmem:[#allocation7 + $0x168] sm:$0xff]
        %v1075 = vld [vmem:[#allocation7 + $0x170] sm:$0xff]
        %v1076 = vld [vmem:[#allocation7 + $0x178] sm:$0xff]
        %v1077 = vld [vmem:[#allocation7 + $0x180] sm:$0xff]
        %v1078 = vld [vmem:[#allocation7 + $0x188] sm:$0xff]
        %v1079 = vld [vmem:[#allocation7 + $0x190] sm:$0xff]
        %v1080 = vld [vmem:[#allocation7 + $0x198] sm:$0xff]
        %v1081 = vld [vmem:[#allocation7 + $0x1a0] sm:$0xff]
        %v1082 = vld [vmem:[#allocation7 + $0x1a8] sm:$0xff]
        %v1083 = vld [vmem:[#allocation7 + $0x1b0] sm:$0xff]
        %v1084 = vld [vmem:[#allocation7 + $0x1b8] sm:$0xff]
        %v1085 = vld [vmem:[#allocation7 + $0x1c0] sm:$0xff]
        %v1086 = vld [vmem:[#allocation7 + $0x1c8] sm:$0xff]
        %v1087 = vld [vmem:[#allocation7 + $0x1d0] sm:$0xff]
        %v1088 = vld [vmem:[#allocation7 + $0x1d8] sm:$0xff]
        %v1089 = vld [vmem:[#allocation7 + $0x1e0] sm:$0xff]
        %v1090 = vld [vmem:[#allocation7 + $0x1e8] sm:$0xff]
        %v1091 = vld [vmem:[#allocation7 + $0x1f0] sm:$0xff]
        %v1092 = vld [vmem:[#allocation7 + $0x1f8] sm:$0xff]
        %v1157 = vunpack.c.l.b16 %v1029
        %v1158 = vunpack.c.h.b16 %v1029
        %v1159 = vunpack.c.l.b16 %v1030
        %v1160 = vunpack.c.h.b16 %v1030
        %v1161 = vunpack.c.l.b16 %v1031
        %v1162 = vunpack.c.h.b16 %v1031
        %v1163 = vunpack.c.l.b16 %v1032
        %v1164 = vunpack.c.h.b16 %v1032
        %v1165 = vunpack.c.l.b16 %v1033
        %v1166 = vunpack.c.h.b16 %v1033
        %v1167 = vunpack.c.l.b16 %v1034
        %v1168 = vunpack.c.h.b16 %v1034
        %v1169 = vunpack.c.l.b16 %v1035
        %v1170 = vunpack.c.h.b16 %v1035
        %v1171 = vunpack.c.l.b16 %v1036
        %v1172 = vunpack.c.h.b16 %v1036
        %v1173 = vunpack.c.l.b16 %v1037
        %v1174 = vunpack.c.h.b16 %v1037
        %v1175 = vunpack.c.l.b16 %v1038
        %v1176 = vunpack.c.h.b16 %v1038
        %v1177 = vunpack.c.l.b16 %v1039
        %v1178 = vunpack.c.h.b16 %v1039
        %v1179 = vunpack.c.l.b16 %v1040
        %v1180 = vunpack.c.h.b16 %v1040
        %v1181 = vunpack.c.l.b16 %v1041
        %v1182 = vunpack.c.h.b16 %v1041
        %v1183 = vunpack.c.l.b16 %v1042
        %v1184 = vunpack.c.h.b16 %v1042
        %v1185 = vunpack.c.l.b16 %v1043
        %v1186 = vunpack.c.h.b16 %v1043
        %v1187 = vunpack.c.l.b16 %v1044
        %v1188 = vunpack.c.h.b16 %v1044
        %v1189 = vunpack.c.l.b16 %v1045
        %v1190 = vunpack.c.h.b16 %v1045
        %v1191 = vunpack.c.l.b16 %v1046
        %v1192 = vunpack.c.h.b16 %v1046
        %v1193 = vunpack.c.l.b16 %v1047
        %v1194 = vunpack.c.h.b16 %v1047
        %v1195 = vunpack.c.l.b16 %v1048
        %v1196 = vunpack.c.h.b16 %v1048
        %v1197 = vunpack.c.l.b16 %v1049
        %v1198 = vunpack.c.h.b16 %v1049
        %v1199 = vunpack.c.l.b16 %v1050
        %v1200 = vunpack.c.h.b16 %v1050
        %v1201 = vunpack.c.l.b16 %v1051
        %v1202 = vunpack.c.h.b16 %v1051
        %v1203 = vunpack.c.l.b16 %v1052
        %v1204 = vunpack.c.h.b16 %v1052
        %v1205 = vunpack.c.l.b16 %v1053
        %v1206 = vunpack.c.h.b16 %v1053
        %v1207 = vunpack.c.l.b16 %v1054
        %v1208 = vunpack.c.h.b16 %v1054
        %v1209 = vunpack.c.l.b16 %v1055
        %v1210 = vunpack.c.h.b16 %v1055
        %v1211 = vunpack.c.l.b16 %v1056
        %v1212 = vunpack.c.h.b16 %v1056
        %v1213 = vunpack.c.l.b16 %v1057
        %v1214 = vunpack.c.h.b16 %v1057
        %v1215 = vunpack.c.l.b16 %v1058
        %v1216 = vunpack.c.h.b16 %v1058
        %v1217 = vunpack.c.l.b16 %v1059
        %v1218 = vunpack.c.h.b16 %v1059
        %v1219 = vunpack.c.l.b16 %v1060
        %v1220 = vunpack.c.h.b16 %v1060
        %v1221 = vunpack.c.l.b16 %v1061
        %v1222 = vunpack.c.h.b16 %v1061
        %v1223 = vunpack.c.l.b16 %v1062
        %v1224 = vunpack.c.h.b16 %v1062
        %v1225 = vunpack.c.l.b16 %v1063
        %v1226 = vunpack.c.h.b16 %v1063
        %v1227 = vunpack.c.l.b16 %v1064
        %v1228 = vunpack.c.h.b16 %v1064
        %v1229 = vunpack.c.l.b16 %v1065
        %v1230 = vunpack.c.h.b16 %v1065
        %v1231 = vunpack.c.l.b16 %v1066
        %v1232 = vunpack.c.h.b16 %v1066
        %v1233 = vunpack.c.l.b16 %v1067
        %v1234 = vunpack.c.h.b16 %v1067
        %v1235 = vunpack.c.l.b16 %v1068
        %v1236 = vunpack.c.h.b16 %v1068
        %v1237 = vunpack.c.l.b16 %v1069
        %v1238 = vunpack.c.h.b16 %v1069
        %v1239 = vunpack.c.l.b16 %v1070
        %v1240 = vunpack.c.h.b16 %v1070
        %v1241 = vunpack.c.l.b16 %v1071
        %v1242 = vunpack.c.h.b16 %v1071
        %v1243 = vunpack.c.l.b16 %v1072
        %v1244 = vunpack.c.h.b16 %v1072
        %v1245 = vunpack.c.l.b16 %v1073
        %v1246 = vunpack.c.h.b16 %v1073
        %v1247 = vunpack.c.l.b16 %v1074
        %v1248 = vunpack.c.h.b16 %v1074
        %v1249 = vunpack.c.l.b16 %v1075
        %v1250 = vunpack.c.h.b16 %v1075
        %v1251 = vunpack.c.l.b16 %v1076
        %v1252 = vunpack.c.h.b16 %v1076
        %v1253 = vunpack.c.l.b16 %v1077
        %v1254 = vunpack.c.h.b16 %v1077
        %v1255 = vunpack.c.l.b16 %v1078
        %v1256 = vunpack.c.h.b16 %v1078
        %v1257 = vunpack.c.l.b16 %v1079
        %v1258 = vunpack.c.h.b16 %v1079
        %v1259 = vunpack.c.l.b16 %v1080
        %v1260 = vunpack.c.h.b16 %v1080
        %v1261 = vunpack.c.l.b16 %v1081
        %v1262 = vunpack.c.h.b16 %v1081
        %v1263 = vunpack.c.l.b16 %v1082
        %v1264 = vunpack.c.h.b16 %v1082
        %v1265 = vunpack.c.l.b16 %v1083
        %v1266 = vunpack.c.h.b16 %v1083
        %v1267 = vunpack.c.l.b16 %v1084
        %v1268 = vunpack.c.h.b16 %v1084
        %v1269 = vunpack.c.l.b16 %v1085
        %v1270 = vunpack.c.h.b16 %v1085
        %v1271 = vunpack.c.l.b16 %v1086
        %v1272 = vunpack.c.h.b16 %v1086
        %v1273 = vunpack.c.l.b16 %v1087
        %v1274 = vunpack.c.h.b16 %v1087
        %v1275 = vunpack.c.l.b16 %v1088
        %v1276 = vunpack.c.h.b16 %v1088
        %v1277 = vunpack.c.l.b16 %v1089
        %v1278 = vunpack.c.h.b16 %v1089
        %v1279 = vunpack.c.l.b16 %v1090
        %v1280 = vunpack.c.h.b16 %v1090
        %v1281 = vunpack.c.l.b16 %v1091
        %v1282 = vunpack.c.h.b16 %v1091
        %v1283 = vunpack.c.l.b16 %v1092
        %v1284 = vunpack.c.h.b16 %v1092
        %v1285 = vpack.c.b16 %v1159, %v1157
        %v1286 = vpack.c.b16 %v1160, %v1158
        %v1287 = vpack.c.b16 %v1163, %v1161
        %v1288 = vpack.c.b16 %v1164, %v1162
        %v1289 = vpack.c.b16 %v1167, %v1165
        %v1290 = vpack.c.b16 %v1168, %v1166
        %v1291 = vpack.c.b16 %v1171, %v1169
        %v1292 = vpack.c.b16 %v1172, %v1170
        %v1293 = vpack.c.b16 %v1175, %v1173
        %v1294 = vpack.c.b16 %v1176, %v1174
        %v1295 = vpack.c.b16 %v1179, %v1177
        %v1296 = vpack.c.b16 %v1180, %v1178
        %v1297 = vpack.c.b16 %v1183, %v1181
        %v1298 = vpack.c.b16 %v1184, %v1182
        %v1299 = vpack.c.b16 %v1187, %v1185
        %v1300 = vpack.c.b16 %v1188, %v1186
        %v1301 = vpack.c.b16 %v1191, %v1189
        %v1302 = vpack.c.b16 %v1192, %v1190
        %v1303 = vpack.c.b16 %v1195, %v1193
        %v1304 = vpack.c.b16 %v1196, %v1194
        %v1305 = vpack.c.b16 %v1199, %v1197
        %v1306 = vpack.c.b16 %v1200, %v1198
        %v1307 = vpack.c.b16 %v1203, %v1201
        %v1308 = vpack.c.b16 %v1204, %v1202
        %v1309 = vpack.c.b16 %v1207, %v1205
        %v1310 = vpack.c.b16 %v1208, %v1206
        %v1311 = vpack.c.b16 %v1211, %v1209
        %v1312 = vpack.c.b16 %v1212, %v1210
        %v1313 = vpack.c.b16 %v1215, %v1213
        %v1314 = vpack.c.b16 %v1216, %v1214
        %v1315 = vpack.c.b16 %v1219, %v1217
        %v1316 = vpack.c.b16 %v1220, %v1218
        %v1317 = vpack.c.b16 %v1223, %v1221
        %v1318 = vpack.c.b16 %v1224, %v1222
        %v1319 = vpack.c.b16 %v1227, %v1225
        %v1320 = vpack.c.b16 %v1228, %v1226
        %v1321 = vpack.c.b16 %v1231, %v1229
        %v1322 = vpack.c.b16 %v1232, %v1230
        %v1323 = vpack.c.b16 %v1235, %v1233
        %v1324 = vpack.c.b16 %v1236, %v1234
        %v1325 = vpack.c.b16 %v1239, %v1237
        %v1326 = vpack.c.b16 %v1240, %v1238
        %v1327 = vpack.c.b16 %v1243, %v1241
        %v1328 = vpack.c.b16 %v1244, %v1242
        %v1329 = vpack.c.b16 %v1247, %v1245
        %v1330 = vpack.c.b16 %v1248, %v1246
        %v1331 = vpack.c.b16 %v1251, %v1249
        %v1332 = vpack.c.b16 %v1252, %v1250
        %v1333 = vpack.c.b16 %v1255, %v1253
        %v1334 = vpack.c.b16 %v1256, %v1254
        %v1335 = vpack.c.b16 %v1259, %v1257
        %v1336 = vpack.c.b16 %v1260, %v1258
        %v1337 = vpack.c.b16 %v1263, %v1261
        %v1338 = vpack.c.b16 %v1264, %v1262
        %v1339 = vpack.c.b16 %v1267, %v1265
        %v1340 = vpack.c.b16 %v1268, %v1266
        %v1341 = vpack.c.b16 %v1271, %v1269
        %v1342 = vpack.c.b16 %v1272, %v1270
        %v1343 = vpack.c.b16 %v1275, %v1273
        %v1344 = vpack.c.b16 %v1276, %v1274
        %v1345 = vpack.c.b16 %v1279, %v1277
        %v1346 = vpack.c.b16 %v1280, %v1278
        %v1347 = vpack.c.b16 %v1283, %v1281
        %v1348 = vpack.c.b16 %v1284, %v1282
        %1413 = vmatprep.subr.bf16.mxu0 %v1300
        %1414 = vmatpush1.bf16.msra.mxu0 %v1299
        %1415 = vmatprep.subr.bf16.mxu0 %v1298
        %1416 = vmatpush1.bf16.msra.mxu0 %v1297
        %1417 = vmatprep.subr.bf16.mxu0 %v1296
        %1418 = vmatpush1.bf16.msra.mxu0 %v1295
        %1419 = vmatprep.subr.bf16.mxu0 %v1294
        %1420 = vmatpush1.bf16.msra.mxu0 %v1293
        %1421 = vmatprep.subr.bf16.mxu0 %v1292
        %1422 = vmatpush1.bf16.msra.mxu0 %v1291
        %1423 = vmatprep.subr.bf16.mxu0 %v1290
        %1424 = vmatpush1.bf16.msra.mxu0 %v1289
        %1425 = vmatprep.subr.bf16.mxu0 %v1288
        %1426 = vmatpush1.bf16.msra.mxu0 %v1287
        %1427 = vmatprep.subr.bf16.mxu0 %v1286
        %1428 = vmatpush1.bf16.msra.mxu0 %v1285
        %1429 = vmatprep.subr.bf16.mxu0 %v1316
        %1430 = vmatpush2.bf16.msra.mxu0 %v1315
        %1431 = vmatprep.subr.bf16.mxu0 %v1314
        %1432 = vmatpush2.bf16.msra.mxu0 %v1313
        %1433 = vmatprep.subr.bf16.mxu0 %v1312
        %1434 = vmatpush2.bf16.msra.mxu0 %v1311
        %1435 = vmatprep.subr.bf16.mxu0 %v1310
        %1436 = vmatpush2.bf16.msra.mxu0 %v1309
        %1437 = vmatprep.subr.bf16.mxu0 %v1308
        %1438 = vmatpush2.bf16.msra.mxu0 %v1307
        %1439 = vmatprep.subr.bf16.mxu0 %v1306
        %1440 = vmatpush2.bf16.msra.mxu0 %v1305
        %1441 = vmatprep.subr.bf16.mxu0 %v1304
        %1442 = vmatpush2.bf16.msra.mxu0 %v1303
        %1443 = vmatprep.subr.bf16.mxu0 %v1302
        %1444 = vmatpush2.bf16.msra.mxu0 %v1301
        %1445 = vmatprep.mubr.bf16.mxu0 %v1026
        %1446 = vmatmul.mubr.bf16.gmra.mxu0 %v1025
        %v1447 = vpop.f32.mrf.mxu0
        %v1448 = vadd.f32 0.0, %v1447
        %v1449 = vpop.f32.mrf.mxu0
        %v1450 = vadd.f32 0.0, %v1449
        %v1451 = vpop.f32.mrf.mxu0
        %v1452 = vpop.f32.mrf.mxu0
        %1453 = vdwg.mxu0
        %1454 = vmatprep.subr.bf16.mxu0 %v1332
        %1455 = vmatpush1.bf16.msra.mxu0 %v1331
        %1456 = vmatprep.subr.bf16.mxu0 %v1330
        %1457 = vmatpush1.bf16.msra.mxu0 %v1329
        %1458 = vmatprep.subr.bf16.mxu0 %v1328
        %1459 = vmatpush1.bf16.msra.mxu0 %v1327
        %1460 = vmatprep.subr.bf16.mxu0 %v1326
        %1461 = vmatpush1.bf16.msra.mxu0 %v1325
        %1462 = vmatprep.subr.bf16.mxu0 %v1324
        %1463 = vmatpush1.bf16.msra.mxu0 %v1323
        %1464 = vmatprep.subr.bf16.mxu0 %v1322
        %1465 = vmatpush1.bf16.msra.mxu0 %v1321
        %1466 = vmatprep.subr.bf16.mxu0 %v1320
        %1467 = vmatpush1.bf16.msra.mxu0 %v1319
        %1468 = vmatprep.subr.bf16.mxu0 %v1318
        %1469 = vmatpush1.bf16.msra.mxu0 %v1317
        %1470 = vmatprep.subr.bf16.mxu0 %v1348
        %1471 = vmatpush2.bf16.msra.mxu0 %v1347
        %1472 = vmatprep.subr.bf16.mxu0 %v1346
        %1473 = vmatpush2.bf16.msra.mxu0 %v1345
        %1474 = vmatprep.subr.bf16.mxu0 %v1344
        %1475 = vmatpush2.bf16.msra.mxu0 %v1343
        %1476 = vmatprep.subr.bf16.mxu0 %v1342
        %1477 = vmatpush2.bf16.msra.mxu0 %v1341
        %1478 = vmatprep.subr.bf16.mxu0 %v1340
        %1479 = vmatpush2.bf16.msra.mxu0 %v1339
        %1480 = vmatprep.subr.bf16.mxu0 %v1338
        %1481 = vmatpush2.bf16.msra.mxu0 %v1337
        %1482 = vmatprep.subr.bf16.mxu0 %v1336
        %1483 = vmatpush2.bf16.msra.mxu0 %v1335
        %1484 = vmatprep.subr.bf16.mxu0 %v1334
        %1485 = vmatpush2.bf16.msra.mxu0 %v1333
        %1486 = vmatprep.mubr.bf16.mxu0 %v1028
        %1487 = vmatmul.mubr.bf16.gmra.mxu0 %v1027
        %v1488 = vpop.f32.mrf.mxu0
        %v1489 = vadd.f32 %v1448, %v1488
        %v1490 = vpop.f32.mrf.mxu0
        %v1491 = vadd.f32 %v1450, %v1490
        %v1492 = vpop.f32.mrf.mxu0
        %v1493 = vpop.f32.mrf.mxu0
        %1494 = vdwg.mxu0
        %v1495 = vld [vmem:[%s5] sm:$0xff]
        %v1496 = vld [vmem:[%s5 + $0x8] sm:$0xff]
        %v1497 = vld [vmem:[%s5 + $0x10] sm:$0xff]
        %v1498 = vld [vmem:[%s5 + $0x18] sm:$0xff]
        %v1499 = vsel %vm839, %v732, 0
        %1501 = vmatprep.subr.mxu0 0.0
        %1502 = vmatpush1.msra.mxu0 0.0
        %1503 = vmatprep.subr.mxu0 0.0
        %1504 = vmatpush1.msra.mxu0 0.0
        %1505 = vmatprep.subr.mxu0 0.0
        %1506 = vmatpush1.msra.mxu0 0.0
        %1507 = vmatprep.subr.mxu0 0.0
        %1508 = vmatpush1.msra.mxu0 0.0
        %1509 = vmatprep.subr.mxu0 0.0
        %1510 = vmatpush1.msra.mxu0 0.0
        %1511 = vmatprep.subr.mxu0 0.0
        %1512 = vmatpush1.msra.mxu0 0.0
        %1513 = vmatprep.subr.mxu0 0.0
        %1514 = vmatpush1.msra.mxu0 0.0
        %1515 = vmatprep.subr.mxu0 0.0
        %1516 = vmatpush1.msra.mxu0 0.0
        %1517 = vmatprep.subr.mxu0 0.0
        %1518 = vmatpush1.msra.mxu0 0.0
        %1519 = vmatprep.subr.mxu0 0.0
        %1520 = vmatpush1.msra.mxu0 0.0
        %1521 = vmatprep.subr.mxu0 0.0
        %1522 = vmatpush1.msra.mxu0 0.0
        %1523 = vmatprep.subr.mxu0 0.0
        %1524 = vmatpush1.msra.mxu0 0.0
        %1525 = vmatprep.subr.mxu0 0.0
        %1526 = vmatpush1.msra.mxu0 %v1498
        %1527 = vmatprep.subr.mxu0 0.0
        %1528 = vmatpush1.msra.mxu0 %v1497
        %1529 = vmatprep.subr.mxu0 0.0
        %1530 = vmatpush1.msra.mxu0 %v1496
        %1531 = vmatprep.subr.mxu0 0.0
        %1532 = vmatpush1.msra.mxu0 %v1495
        %1533 = vmatprep.subr.mxu0 0.0
        %1534 = vmatpush2.msra.mxu0 0.0
        %1535 = vmatprep.subr.mxu0 0.0
        %1536 = vmatpush2.msra.mxu0 0.0
        %1537 = vmatprep.subr.mxu0 0.0
        %1538 = vmatpush2.msra.mxu0 0.0
        %1539 = vmatprep.subr.mxu0 0.0
        %1540 = vmatpush2.msra.mxu0 0.0
        %1541 = vmatprep.subr.mxu0 0.0
        %1542 = vmatpush2.msra.mxu0 0.0
        %1543 = vmatprep.subr.mxu0 0.0
        %1544 = vmatpush2.msra.mxu0 0.0
        %1545 = vmatprep.subr.mxu0 0.0
        %1546 = vmatpush2.msra.mxu0 0.0
        %1547 = vmatprep.subr.mxu0 0.0
        %1548 = vmatpush2.msra.mxu0 0.0
        %1549 = vmatprep.subr.mxu0 0.0
        %1550 = vmatpush2.msra.mxu0 0.0
        %1551 = vmatprep.subr.mxu0 0.0
        %1552 = vmatpush2.msra.mxu0 0.0
        %1553 = vmatprep.subr.mxu0 0.0
        %1554 = vmatpush2.msra.mxu0 0.0
        %1555 = vmatprep.subr.mxu0 0.0
        %1556 = vmatpush2.msra.mxu0 0.0
        %1557 = vmatprep.subr.mxu0 0.0
        %1558 = vmatpush2.msra.mxu0 0.0
        %1559 = vmatprep.subr.mxu0 0.0
        %1560 = vmatpush2.msra.mxu0 0.0
        %1561 = vmatprep.subr.mxu0 0.0
        %1562 = vmatpush2.msra.mxu0 0.0
        %1563 = vmatprep.subr.mxu0 0.0
        %1564 = vmatpush2.msra.mxu0 0.0
        %1565 = vmatprep.mubr.f32.mxu0 0.0
        %1566 = vmatmul.mubr.f32.gmra.mxu0 %v1499
        %v1567 = vpop.f32.mrf.mxu0
        %v1568 = vadd.f32 0.0, %v1567
        %v1569 = vpop.f32.mrf.mxu0
        %1570 = vdwg.mxu0
        %v1571 = vmul.f32 %v990, %v1568
        %v1572 = vlaneseq
        %v1573 = vshrl.u32 %v1572, 7
        %v1574 = vsub.s32 0, %v1573
        %v1575 = vrot.slane %v1571, %v1574
        %1577 = vbcast.lane.b32.xlu0 %v1575, 256
        %v1578 = vpop.permute.xlu0 %1577
        %s1580 = sor.u32 256, 8
        %1581 = vbcast.lane.b32.xlu0 %v1575, %s1580
        %v1582 = vpop.permute.xlu0 %1581
        %s1584 = sor.u32 256, 16
        %1585 = vbcast.lane.b32.xlu0 %v1575, %s1584
        %v1586 = vpop.permute.xlu0 %1585
        %s1588 = sor.u32 256, 24
        %1589 = vbcast.lane.b32.xlu0 %v1575, %s1588
        %v1590 = vpop.permute.xlu0 %1589
        %v1591 = vlaneseq
        %v1592 = vshrl.u32 %v1591, 7
        %v1593 = vsub.s32 1, %v1592
        %v1594 = vrot.slane %v1571, %v1593
        %1596 = vbcast.lane.b32.xlu0 %v1594, 256
        %v1597 = vpop.permute.xlu0 %1596
        %s1599 = sor.u32 256, 8
        %1600 = vbcast.lane.b32.xlu0 %v1594, %s1599
        %v1601 = vpop.permute.xlu0 %1600
        %s1603 = sor.u32 256, 16
        %1604 = vbcast.lane.b32.xlu0 %v1594, %s1603
        %v1605 = vpop.permute.xlu0 %1604
        %s1607 = sor.u32 256, 24
        %1608 = vbcast.lane.b32.xlu0 %v1594, %s1607
        %v1609 = vpop.permute.xlu0 %1608
        %v1610 = vlaneseq
        %v1611 = vshrl.u32 %v1610, 7
        %v1612 = vsub.s32 2, %v1611
        %v1613 = vrot.slane %v1571, %v1612
        %1615 = vbcast.lane.b32.xlu0 %v1613, 256
        %v1616 = vpop.permute.xlu0 %1615
        %s1618 = sor.u32 256, 8
        %1619 = vbcast.lane.b32.xlu0 %v1613, %s1618
        %v1620 = vpop.permute.xlu0 %1619
        %s1622 = sor.u32 256, 16
        %1623 = vbcast.lane.b32.xlu0 %v1613, %s1622
        %v1624 = vpop.permute.xlu0 %1623
        %s1626 = sor.u32 256, 24
        %1627 = vbcast.lane.b32.xlu0 %v1613, %s1626
        %v1628 = vpop.permute.xlu0 %1627
        %v1629 = vlaneseq
        %v1630 = vshrl.u32 %v1629, 7
        %v1631 = vsub.s32 3, %v1630
        %v1632 = vrot.slane %v1571, %v1631
        %1634 = vbcast.lane.b32.xlu0 %v1632, 256
        %v1635 = vpop.permute.xlu0 %1634
        %s1637 = sor.u32 256, 8
        %1638 = vbcast.lane.b32.xlu0 %v1632, %s1637
        %v1639 = vpop.permute.xlu0 %1638
        %s1641 = sor.u32 256, 16
        %1642 = vbcast.lane.b32.xlu0 %v1632, %s1641
        %v1643 = vpop.permute.xlu0 %1642
        %s1645 = sor.u32 256, 24
        %1646 = vbcast.lane.b32.xlu0 %v1632, %s1645
        %v1647 = vpop.permute.xlu0 %1646
        %v1650 = vcombine.low %v1489, %v1491
        %v1652 = vunpack.c.l.s4 1966171168
        %v1653 = vunpack.c.0.s8 %v1652
        %v1654 = vlaneseq
        %v1655 = vshrl.u32 %v1654, 7
        %v1656 = vsub.s32 %v1653, %v1655
        %v1657 = vrot.slane %v1650, %v1656
        %v1658 = vcombine.high %v1657, %v1657
        %v1660 = vunpack.c.l.s4 1966171168
        %v1661 = vunpack.c.0.s8 %v1660
        %v1662 = vlaneseq
        %v1663 = vshrl.u32 %v1662, 7
        %v1664 = vsub.s32 %v1661, %v1663
        %v1665 = vrot.slane %v1657, %v1664
        %v1667 = vunpack.c.l.s4 1966171168
        %v1668 = vunpack.c.0.s8 %v1667
        %v1669 = vlaneseq
        %v1670 = vshrl.u32 %v1669, 7
        %v1671 = vsub.s32 %v1668, %v1670
        %v1672 = vrot.slane %v1658, %v1671
        %v1673 = vcombine.high %v1665, %v1665
        %v1674 = vcombine.high %v1672, %v1672
        %v1675 = vlaneseq
        %v1676 = vshrl.u32 %v1675, 7
        %v1677 = vsub.s32 0, %v1676
        %v1678 = vrot.slane %v1665, %v1677
        %v1679 = vlaneseq
        %v1680 = vshrl.u32 %v1679, 7
        %v1681 = vsub.s32 1, %v1680
        %v1682 = vrot.slane %v1665, %v1681
        %v1683 = vlaneseq
        %v1684 = vshrl.u32 %v1683, 7
        %v1685 = vsub.s32 0, %v1684
        %v1686 = vrot.slane %v1672, %v1685
        %v1687 = vlaneseq
        %v1688 = vshrl.u32 %v1687, 7
        %v1689 = vsub.s32 1, %v1688
        %v1690 = vrot.slane %v1672, %v1689
        %v1691 = vlaneseq
        %v1692 = vshrl.u32 %v1691, 7
        %v1693 = vsub.s32 0, %v1692
        %v1694 = vrot.slane %v1673, %v1693
        %v1695 = vlaneseq
        %v1696 = vshrl.u32 %v1695, 7
        %v1697 = vsub.s32 1, %v1696
        %v1698 = vrot.slane %v1673, %v1697
        %v1699 = vlaneseq
        %v1700 = vshrl.u32 %v1699, 7
        %v1701 = vsub.s32 0, %v1700
        %v1702 = vrot.slane %v1674, %v1701
        %v1703 = vlaneseq
        %v1704 = vshrl.u32 %v1703, 7
        %v1705 = vsub.s32 1, %v1704
        %v1706 = vrot.slane %v1674, %v1705
        %v1715 = vmul.f32 %v1578, %v1678
        %v1716 = vmul.f32 %v1578, %v1682
        %v1717 = vmul.f32 %v1582, %v1678
        %v1718 = vmul.f32 %v1582, %v1682
        %v1719 = vmul.f32 %v1586, %v1678
        %v1720 = vmul.f32 %v1586, %v1682
        %v1721 = vmul.f32 %v1590, %v1678
        %v1722 = vmul.f32 %v1590, %v1682
        %v1723 = vmul.f32 %v1597, %v1686
        %v1724 = vmul.f32 %v1597, %v1690
        %v1725 = vmul.f32 %v1601, %v1686
        %v1726 = vmul.f32 %v1601, %v1690
        %v1727 = vmul.f32 %v1605, %v1686
        %v1728 = vmul.f32 %v1605, %v1690
        %v1729 = vmul.f32 %v1609, %v1686
        %v1730 = vmul.f32 %v1609, %v1690
        %v1731 = vmul.f32 %v1616, %v1694
        %v1732 = vmul.f32 %v1616, %v1698
        %v1733 = vmul.f32 %v1620, %v1694
        %v1734 = vmul.f32 %v1620, %v1698
        %v1735 = vmul.f32 %v1624, %v1694
        %v1736 = vmul.f32 %v1624, %v1698
        %v1737 = vmul.f32 %v1628, %v1694
        %v1738 = vmul.f32 %v1628, %v1698
        %v1739 = vmul.f32 %v1635, %v1702
        %v1740 = vmul.f32 %v1635, %v1706
        %v1741 = vmul.f32 %v1639, %v1702
        %v1742 = vmul.f32 %v1639, %v1706
        %v1743 = vmul.f32 %v1643, %v1702
        %v1744 = vmul.f32 %v1643, %v1706
        %v1745 = vmul.f32 %v1647, %v1702
        %v1746 = vmul.f32 %v1647, %v1706
        %v1747 = vsub.f32 0.0, %v1715
        %v1748 = vsub.f32 0.0, %v1716
        %v1749 = vsub.f32 0.0, %v1717
        %v1750 = vsub.f32 0.0, %v1718
        %v1751 = vsub.f32 0.0, %v1719
        %v1752 = vsub.f32 0.0, %v1720
        %v1753 = vsub.f32 0.0, %v1721
        %v1754 = vsub.f32 0.0, %v1722
        %v1755 = vsub.f32 0.0, %v1723
        %v1756 = vsub.f32 0.0, %v1724
        %v1757 = vsub.f32 0.0, %v1725
        %v1758 = vsub.f32 0.0, %v1726
        %v1759 = vsub.f32 0.0, %v1727
        %v1760 = vsub.f32 0.0, %v1728
        %v1761 = vsub.f32 0.0, %v1729
        %v1762 = vsub.f32 0.0, %v1730
        %v1763 = vsub.f32 0.0, %v1731
        %v1764 = vsub.f32 0.0, %v1732
        %v1765 = vsub.f32 0.0, %v1733
        %v1766 = vsub.f32 0.0, %v1734
        %v1767 = vsub.f32 0.0, %v1735
        %v1768 = vsub.f32 0.0, %v1736
        %v1769 = vsub.f32 0.0, %v1737
        %v1770 = vsub.f32 0.0, %v1738
        %v1771 = vsub.f32 0.0, %v1739
        %v1772 = vsub.f32 0.0, %v1740
        %v1773 = vsub.f32 0.0, %v1741
        %v1774 = vsub.f32 0.0, %v1742
        %v1775 = vsub.f32 0.0, %v1743
        %v1776 = vsub.f32 0.0, %v1744
        %v1777 = vsub.f32 0.0, %v1745
        %v1778 = vsub.f32 0.0, %v1746
        %v1779 = vmul.f32 %v1747, 1.442695
        %v1780 = vpow.pop %v1779
        %v1781 = vmul.f32 %v1748, 1.442695
        %v1782 = vpow.pop %v1781
        %v1783 = vmul.f32 %v1749, 1.442695
        %v1784 = vpow.pop %v1783
        %v1785 = vmul.f32 %v1750, 1.442695
        %v1786 = vpow.pop %v1785
        %v1787 = vmul.f32 %v1751, 1.442695
        %v1788 = vpow.pop %v1787
        %v1789 = vmul.f32 %v1752, 1.442695
        %v1790 = vpow.pop %v1789
        %v1791 = vmul.f32 %v1753, 1.442695
        %v1792 = vpow.pop %v1791
        %v1793 = vmul.f32 %v1754, 1.442695
        %v1794 = vpow.pop %v1793
        %v1795 = vmul.f32 %v1755, 1.442695
        %v1796 = vpow.pop %v1795
        %v1797 = vmul.f32 %v1756, 1.442695
        %v1798 = vpow.pop %v1797
        %v1799 = vmul.f32 %v1757, 1.442695
        %v1800 = vpow.pop %v1799
        %v1801 = vmul.f32 %v1758, 1.442695
        %v1802 = vpow.pop %v1801
        %v1803 = vmul.f32 %v1759, 1.442695
        %v1804 = vpow.pop %v1803
        %v1805 = vmul.f32 %v1760, 1.442695
        %v1806 = vpow.pop %v1805
        %v1807 = vmul.f32 %v1761, 1.442695
        %v1808 = vpow.pop %v1807
        %v1809 = vmul.f32 %v1762, 1.442695
        %v1810 = vpow.pop %v1809
        %v1811 = vmul.f32 %v1763, 1.442695
        %v1812 = vpow.pop %v1811
        %v1813 = vmul.f32 %v1764, 1.442695
        %v1814 = vpow.pop %v1813
        %v1815 = vmul.f32 %v1765, 1.442695
        %v1816 = vpow.pop %v1815
        %v1817 = vmul.f32 %v1766, 1.442695
        %v1818 = vpow.pop %v1817
        %v1819 = vmul.f32 %v1767, 1.442695
        %v1820 = vpow.pop %v1819
        %v1821 = vmul.f32 %v1768, 1.442695
        %v1822 = vpow.pop %v1821
        %v1823 = vmul.f32 %v1769, 1.442695
        %v1824 = vpow.pop %v1823
        %v1825 = vmul.f32 %v1770, 1.442695
        %v1826 = vpow.pop %v1825
        %v1827 = vmul.f32 %v1771, 1.442695
        %v1828 = vpow.pop %v1827
        %v1829 = vmul.f32 %v1772, 1.442695
        %v1830 = vpow.pop %v1829
        %v1831 = vmul.f32 %v1773, 1.442695
        %v1832 = vpow.pop %v1831
        %v1833 = vmul.f32 %v1774, 1.442695
        %v1834 = vpow.pop %v1833
        %v1835 = vmul.f32 %v1775, 1.442695
        %v1836 = vpow.pop %v1835
        %v1837 = vmul.f32 %v1776, 1.442695
        %v1838 = vpow.pop %v1837
        %v1839 = vmul.f32 %v1777, 1.442695
        %v1840 = vpow.pop %v1839
        %v1841 = vmul.f32 %v1778, 1.442695
        %v1842 = vpow.pop %v1841
        %v1843 = vadd.f32 %v1780, 1.0
        %v1844 = vadd.f32 %v1782, 1.0
        %v1845 = vadd.f32 %v1784, 1.0
        %v1846 = vadd.f32 %v1786, 1.0
        %v1847 = vadd.f32 %v1788, 1.0
        %v1848 = vadd.f32 %v1790, 1.0
        %v1849 = vadd.f32 %v1792, 1.0
        %v1850 = vadd.f32 %v1794, 1.0
        %v1851 = vadd.f32 %v1796, 1.0
        %v1852 = vadd.f32 %v1798, 1.0
        %v1853 = vadd.f32 %v1800, 1.0
        %v1854 = vadd.f32 %v1802, 1.0
        %v1855 = vadd.f32 %v1804, 1.0
        %v1856 = vadd.f32 %v1806, 1.0
        %v1857 = vadd.f32 %v1808, 1.0
        %v1858 = vadd.f32 %v1810, 1.0
        %v1859 = vadd.f32 %v1812, 1.0
        %v1860 = vadd.f32 %v1814, 1.0
        %v1861 = vadd.f32 %v1816, 1.0
        %v1862 = vadd.f32 %v1818, 1.0
        %v1863 = vadd.f32 %v1820, 1.0
        %v1864 = vadd.f32 %v1822, 1.0
        %v1865 = vadd.f32 %v1824, 1.0
        %v1866 = vadd.f32 %v1826, 1.0
        %v1867 = vadd.f32 %v1828, 1.0
        %v1868 = vadd.f32 %v1830, 1.0
        %v1869 = vadd.f32 %v1832, 1.0
        %v1870 = vadd.f32 %v1834, 1.0
        %v1871 = vadd.f32 %v1836, 1.0
        %v1872 = vadd.f32 %v1838, 1.0
        %v1873 = vadd.f32 %v1840, 1.0
        %v1874 = vadd.f32 %v1842, 1.0
        %v1875 = vrcp.pop %v1843
        %v1876 = vrcp.pop %v1844
        %v1877 = vrcp.pop %v1845
        %v1878 = vrcp.pop %v1846
        %v1879 = vrcp.pop %v1847
        %v1880 = vrcp.pop %v1848
        %v1881 = vrcp.pop %v1849
        %v1882 = vrcp.pop %v1850
        %v1883 = vrcp.pop %v1851
        %v1884 = vrcp.pop %v1852
        %v1885 = vrcp.pop %v1853
        %v1886 = vrcp.pop %v1854
        %v1887 = vrcp.pop %v1855
        %v1888 = vrcp.pop %v1856
        %v1889 = vrcp.pop %v1857
        %v1890 = vrcp.pop %v1858
        %v1891 = vrcp.pop %v1859
        %v1892 = vrcp.pop %v1860
        %v1893 = vrcp.pop %v1861
        %v1894 = vrcp.pop %v1862
        %v1895 = vrcp.pop %v1863
        %v1896 = vrcp.pop %v1864
        %v1897 = vrcp.pop %v1865
        %v1898 = vrcp.pop %v1866
        %v1899 = vrcp.pop %v1867
        %v1900 = vrcp.pop %v1868
        %v1901 = vrcp.pop %v1869
        %v1902 = vrcp.pop %v1870
        %v1903 = vrcp.pop %v1871
        %v1904 = vrcp.pop %v1872
        %v1905 = vrcp.pop %v1873
        %v1906 = vrcp.pop %v1874
        %v1907 = vld [vmem:[%s288] sm:$0xff]
        %v1908 = vld [vmem:[%s288 + $0x8] sm:$0xff]
        %v1909 = vld [vmem:[%s288 + $0x10] sm:$0xff]
        %v1910 = vld [vmem:[%s288 + $0x18] sm:$0xff]
        %v1911 = vld [vmem:[%s288 + $0x20] sm:$0xff]
        %v1912 = vld [vmem:[%s288 + $0x28] sm:$0xff]
        %v1913 = vld [vmem:[%s288 + $0x30] sm:$0xff]
        %v1914 = vld [vmem:[%s288 + $0x38] sm:$0xff]
        %v1915 = vld [vmem:[%s288 + $0x40] sm:$0xff]
        %v1916 = vld [vmem:[%s288 + $0x48] sm:$0xff]
        %v1917 = vld [vmem:[%s288 + $0x50] sm:$0xff]
        %v1918 = vld [vmem:[%s288 + $0x58] sm:$0xff]
        %v1919 = vld [vmem:[%s288 + $0x60] sm:$0xff]
        %v1920 = vld [vmem:[%s288 + $0x68] sm:$0xff]
        %v1921 = vld [vmem:[%s288 + $0x70] sm:$0xff]
        %v1922 = vld [vmem:[%s288 + $0x78] sm:$0xff]
        %v1923 = vld [vmem:[%s288 + $0x80] sm:$0xff]
        %v1924 = vld [vmem:[%s288 + $0x88] sm:$0xff]
        %v1925 = vld [vmem:[%s288 + $0x90] sm:$0xff]
        %v1926 = vld [vmem:[%s288 + $0x98] sm:$0xff]
        %v1927 = vld [vmem:[%s288 + $0xa0] sm:$0xff]
        %v1928 = vld [vmem:[%s288 + $0xa8] sm:$0xff]
        %v1929 = vld [vmem:[%s288 + $0xb0] sm:$0xff]
        %v1930 = vld [vmem:[%s288 + $0xb8] sm:$0xff]
        %v1931 = vld [vmem:[%s288 + $0xc0] sm:$0xff]
        %v1932 = vld [vmem:[%s288 + $0xc8] sm:$0xff]
        %v1933 = vld [vmem:[%s288 + $0xd0] sm:$0xff]
        %v1934 = vld [vmem:[%s288 + $0xd8] sm:$0xff]
        %v1935 = vld [vmem:[%s288 + $0xe0] sm:$0xff]
        %v1936 = vld [vmem:[%s288 + $0xe8] sm:$0xff]
        %v1937 = vld [vmem:[%s288 + $0xf0] sm:$0xff]
        %v1938 = vld [vmem:[%s288 + $0xf8] sm:$0xff]
        %v1939 = vmul.f32 %v1875, %v1907
        %v1940 = vmul.f32 %v1876, %v1908
        %v1941 = vmul.f32 %v1877, %v1909
        %v1942 = vmul.f32 %v1878, %v1910
        %v1943 = vmul.f32 %v1879, %v1911
        %v1944 = vmul.f32 %v1880, %v1912
        %v1945 = vmul.f32 %v1881, %v1913
        %v1946 = vmul.f32 %v1882, %v1914
        %v1947 = vmul.f32 %v1883, %v1915
        %v1948 = vmul.f32 %v1884, %v1916
        %v1949 = vmul.f32 %v1885, %v1917
        %v1950 = vmul.f32 %v1886, %v1918
        %v1951 = vmul.f32 %v1887, %v1919
        %v1952 = vmul.f32 %v1888, %v1920
        %v1953 = vmul.f32 %v1889, %v1921
        %v1954 = vmul.f32 %v1890, %v1922
        %v1955 = vmul.f32 %v1891, %v1923
        %v1956 = vmul.f32 %v1892, %v1924
        %v1957 = vmul.f32 %v1893, %v1925
        %v1958 = vmul.f32 %v1894, %v1926
        %v1959 = vmul.f32 %v1895, %v1927
        %v1960 = vmul.f32 %v1896, %v1928
        %v1961 = vmul.f32 %v1897, %v1929
        %v1962 = vmul.f32 %v1898, %v1930
        %v1963 = vmul.f32 %v1899, %v1931
        %v1964 = vmul.f32 %v1900, %v1932
        %v1965 = vmul.f32 %v1901, %v1933
        %v1966 = vmul.f32 %v1902, %v1934
        %v1967 = vmul.f32 %v1903, %v1935
        %v1968 = vmul.f32 %v1904, %v1936
        %v1969 = vmul.f32 %v1905, %v1937
        %v1970 = vmul.f32 %v1906, %v1938
        %1971 = vst [vmem:[%s325] sm:$0xff] %v1939
        %1972 = vst [vmem:[%s325 + $0x8] sm:$0xff] %v1940
        %1973 = vst [vmem:[%s325 + $0x10] sm:$0xff] %v1941
        %1974 = vst [vmem:[%s325 + $0x18] sm:$0xff] %v1942
        %1975 = vst [vmem:[%s325 + $0x20] sm:$0xff] %v1943
        %1976 = vst [vmem:[%s325 + $0x28] sm:$0xff] %v1944
        %1977 = vst [vmem:[%s325 + $0x30] sm:$0xff] %v1945
        %1978 = vst [vmem:[%s325 + $0x38] sm:$0xff] %v1946
        %1979 = vst [vmem:[%s325 + $0x40] sm:$0xff] %v1947
        %1980 = vst [vmem:[%s325 + $0x48] sm:$0xff] %v1948
        %1981 = vst [vmem:[%s325 + $0x50] sm:$0xff] %v1949
        %1982 = vst [vmem:[%s325 + $0x58] sm:$0xff] %v1950
        %1983 = vst [vmem:[%s325 + $0x60] sm:$0xff] %v1951
        %1984 = vst [vmem:[%s325 + $0x68] sm:$0xff] %v1952
        %1985 = vst [vmem:[%s325 + $0x70] sm:$0xff] %v1953
        %1986 = vst [vmem:[%s325 + $0x78] sm:$0xff] %v1954
        %1987 = vst [vmem:[%s325 + $0x80] sm:$0xff] %v1955
        %1988 = vst [vmem:[%s325 + $0x88] sm:$0xff] %v1956
        %1989 = vst [vmem:[%s325 + $0x90] sm:$0xff] %v1957
        %1990 = vst [vmem:[%s325 + $0x98] sm:$0xff] %v1958
        %1991 = vst [vmem:[%s325 + $0xa0] sm:$0xff] %v1959
        %1992 = vst [vmem:[%s325 + $0xa8] sm:$0xff] %v1960
        %1993 = vst [vmem:[%s325 + $0xb0] sm:$0xff] %v1961
        %1994 = vst [vmem:[%s325 + $0xb8] sm:$0xff] %v1962
        %1995 = vst [vmem:[%s325 + $0xc0] sm:$0xff] %v1963
        %1996 = vst [vmem:[%s325 + $0xc8] sm:$0xff] %v1964
        %1997 = vst [vmem:[%s325 + $0xd0] sm:$0xff] %v1965
        %1998 = vst [vmem:[%s325 + $0xd8] sm:$0xff] %v1966
        %1999 = vst [vmem:[%s325 + $0xe0] sm:$0xff] %v1967
        %2000 = vst [vmem:[%s325 + $0xe8] sm:$0xff] %v1968
        %2001 = vst [vmem:[%s325 + $0xf0] sm:$0xff] %v1969
        %2002 = vst [vmem:[%s325 + $0xf8] sm:$0xff] %v1970
        %s2003 = sand.u32 %s170, 1
        %s2004 = scalar_lea.sflag [#allocation4], %s2003
        %s2005 = sand.u32 %s170, 1
        %s2006 = smul.addr %s2005, 256
        %s2007 = scalar_lea.vmem [#allocation8], %s2006
        // Predicated region
        $region57: #{tpu_custom_call.1} parent=43 // pred_check
          %p2008 = pneg %p180
        $region58: #{tpu_custom_call.1} parent=43 // pred_check_branch
          %2010 = sbr.rel (%p2008) target = $region60
        $region59: #{tpu_custom_call.1} parent=43 // pred_region
          %s2011 = smul.u32 4, %s26
          %s2013 = ssub.s32 4096, 4096
          %2014 = vsyncadd %s2004, %s2013
          %s2015 = smul.addr %s2011, 8
          %s2016 = smul.addr %s2015, 128
          %s2017 = scalar_lea.hbm %s6, %s2016
          %s2018 = sshll.u32 %s2007, 4
          %s2019 = int_to_ptr.vmem [resolvable:$true] %s2018
          %2024 = dma.vmem_to_hbm [thread:$0]  %s2019, 4096, %s2017, %s2004, 256, 256, 16
        $region60: #{tpu_custom_call.1} parent=43 // pred_fallthru
          _
      $region44: #{tpu_custom_call.1} parent=5 // pred_fallthru
        _
      %p2025 = scmp.le.s32.totalorder 2, %s21
      // Predicated region
      $region61: #{tpu_custom_call.1} parent=5 // pred_check
        %p2026 = pneg %p2025
      $region62: #{tpu_custom_call.1} parent=5 // pred_check_branch
        %2028 = sbr.rel (%p2026) target = $region64
      $region63: #{tpu_custom_call.1} parent=5 // pred_region
        %s2029 = ssub.s32 %s21, 2
        // Predicated region
        $region65: #{tpu_custom_call.1} parent=63 // pred_check
          %p2030 = pneg %p186
        $region66: #{tpu_custom_call.1} parent=63 // pred_check_branch
          %2032 = sbr.rel (%p2030) target = $region68
        $region67: #{tpu_custom_call.1} parent=63 // pred_region
          %s2033 = sand.u32 %s171, 1
          %s2034 = scalar_lea.sflag [#allocation4], %s2033
          %s2035 = sand.u32 %s171, 1
          %s2036 = smul.addr %s2035, 256
          %s2037 = scalar_lea.vmem [#allocation8], %s2036
          %2038 = dma.done %s2034, 4096
        $region68: #{tpu_custom_call.1} parent=63 // pred_fallthru
          _
      $region64: #{tpu_custom_call.1} parent=5 // pred_fallthru
        _
    $region6: #{tpu_custom_call.1} parent=1 // loop_footer
      %s25 = sadd.s32 1, %s21
    $region7: #{tpu_custom_call.1} parent=1 // loop_footer_branch
      %20 = sbr.rel target = $region3
    $region8: #{tpu_custom_call.1} parent=1 // loop_exit
      _
    %2039 = vsyncpa [#allocation3], 1
    %s2040 = scalar_lea.sflag [#allocation3], 1
    %2041 = vsyncpa %s2040, 1
    %2042 = vsyncpa [#allocation6], 1
    %s2043 = scalar_lea.sflag [#allocation6], 1
    %2044 = vsyncpa %s2043, 1
    %2045 = vsyncpa [#allocation4], 1
    %s2046 = scalar_lea.sflag [#allocation4], 1
    %2047 = vsyncpa %s2046, 1

</llo_original>
